<compile_context>
chip_gen: v7x
topology: tpu7x:2x2x1
jax: 0.10.0
libtpu: 0.0.40
codegen_flags: <defaults>
</compile_context>

<pallas_src>
import functools

import jax
import jax.numpy as jnp
import numpy as np
from jax import lax
from jax.experimental import pallas as pl
from jax.experimental.pallas import tpu as pltpu


def _mlp_kernel(x_ref, w_ref, b_ref, out_ref, *, layer_meta, relu_flags,
                matmul_dtype, lane_chunk, n_chunks):
    """Fused feature-major MLP over one batch tile.

    x_ref  : [in_features, batch_tile]   (batch dense on the 128-lane axis)
    w_ref  : [W_rows, W_cols]  packed weights; layer i at rows
             layer_meta[i][0] : +rows_i, cols 0:cols_i.  Hidden layers are stored
             in torch layout [out_i, in_i]; the head is stored as a column [in_L, 1].
    b_ref  : [B_rows, 1]       packed biases; layer i at rows layer_meta[i][3] : +out_i.
    out_ref: [1, batch_tile]   lane-dense output row.
    """
    n_layers = len(layer_meta)

    def compute_chunk(off):
        # Activations stay feature-major [features, lane_chunk].
        h = x_ref[:, pl.ds(off, lane_chunk)].astype(matmul_dtype)
        for i in range(n_layers - 1):
            w_off, out_i, in_i, b_off = layer_meta[i]
            w = w_ref[w_off:w_off + out_i, 0:in_i].astype(matmul_dtype)  # [out_i, in_i]
            b = b_ref[b_off:b_off + out_i, 0:1]                          # [out_i, 1] f32
            # Contract W's in-dim (axis 1) with h's feature axis (axis 0):
            # result is feature-major [out_i, lane_chunk], no transposes anywhere.
            h = lax.dot_general(w, h, (((1,), (0,)), ((), ())),
                                preferred_element_type=jnp.float32)
            h = h + b                          # f32 bias add, broadcast along lanes
            if relu_flags[i]:
                h = jnp.maximum(h, 0.0)        # f32 elementwise (v5e-friendly)
            if i < n_layers - 2:
                h = h.astype(matmul_dtype)     # only MXU operands get down-cast

        # Final hidden -> 1 layer: VPU multiply + cross-sublane (XLU) reduce instead
        # of an MXU matmul with a single valid output column.
        w_off, in_last, _, b_off = layer_meta[-1]
        w_last = w_ref[w_off:w_off + in_last, 0:1]    # [in_L, 1] f32
        b_last = b_ref[b_off:b_off + 1, 0:1]          # [1, 1]    f32
        acc = jnp.sum(h * w_last, axis=0, keepdims=True) + b_last   # [1, lane_chunk]
        if relu_flags[-1]:
            acc = jnp.maximum(acc, 0.0)
        out_ref[:, pl.ds(off, lane_chunk)] = acc.astype(out_ref.dtype)

    if n_chunks == 1:
        compute_chunk(0)
    else:
        # Bounded live ranges: fori_loop (unrolled) keeps activations <= ~16 vregs
        # per chunk instead of holding one giant [hidden, batch_tile] value.
        def body(c, carry):
            off = pl.multiple_of(c * lane_chunk, lane_chunk)
            compute_chunk(off)
            return carry
        lax.fori_loop(0, n_chunks, body, 0, unroll=True)


def _pack_params(weights, biases):
    """Pack all layer weights into one 2-D array and all biases into another.

    Hidden layers keep torch layout [out_i, in_i]; the final Linear(., 1) is stored
    transposed as a column [in_L, 1] so the kernel's VPU head can use it directly.
    Each layer's row block is padded to a multiple of 8 so in-kernel static ref
    slices are sublane-aligned.
    """
    n_layers = len(weights)

    def pad8(r):
        return -(-r // 8) * 8

    w_rows, w_cols = [], []
    for i, w in enumerate(weights):
        if i < n_layers - 1:
            w_rows.append(int(w.shape[0]))
            w_cols.append(int(w.shape[1]))
        else:
            w_rows.append(int(w.shape[1]))   # stored transposed -> in_L rows
            w_cols.append(1)
    col_width = max(w_cols)

    w_offs, off = [], 0
    for r in w_rows:
        w_offs.append(off)
        off += pad8(r)
    w_packed = np.zeros((off, col_width), np.float32)
    for i, w in enumerate(weights):
        w_np = np.asarray(w, np.float32)
        if i == n_layers - 1:
            w_np = w_np.T                                   # [in_L, 1]
        w_packed[w_offs[i]:w_offs[i] + w_np.shape[0], :w_np.shape[1]] = w_np

    b_rows = [int(np.asarray(b).shape[0]) for b in biases]
    b_offs, off = [], 0
    for r in b_rows:
        b_offs.append(off)
        off += pad8(r)
    b_packed = np.zeros((off, 1), np.float32)
    for i, b in enumerate(biases):
        b_packed[b_offs[i]:b_offs[i] + b_rows[i], 0] = np.asarray(b, np.float32)

    layer_meta = tuple(
        (w_offs[i], w_rows[i], w_cols[i], b_offs[i]) for i in range(n_layers))
    return jnp.asarray(w_packed), jnp.asarray(b_packed), layer_meta


def discriminative_embedding_forward(x, weights, biases, relu_flags, *,
                                     batch_tile=1024, lane_chunk=512,
                                     matmul_dtype=jnp.float32):
    """Forward pass of DiscriminativeEmbedding as one fused Pallas kernel.

    x          : [B, in_features] f32
    weights[i] : torch-layout [out_i, in_i]
    biases[i]  : [out_i]
    Returns jnp.squeeze(mlp(x)) -- shape [B] (scalar if B == 1), matching
    torch.squeeze(self.model(args)).
    """
    B, in_features = x.shape
    n_layers = len(weights)
    assert n_layers >= 2, "module always has embed_link + final head"
    assert len(biases) == n_layers and len(relu_flags) == n_layers

    # ---- batch tiling -------------------------------------------------------
    # Lane-dense tiles (multiples of 128).  Keep >= 2 tiles and an even tile count
    # so both v7x TensorCores get balanced work; keep tiles big so single-TC
    # v5e/v6e see as few ~0.35us grid-step overheads as possible.
    batch_tile = max(128, 128 * (int(batch_tile) // 128))
    batch_tile = min(batch_tile, max(128, 128 * pl.cdiv(pl.cdiv(B, 2), 128)))
    n_tiles = pl.cdiv(B, batch_tile)
    if n_tiles > 1 and n_tiles % 2 == 1:
        batch_tile = max(128, 128 * pl.cdiv(pl.cdiv(B, n_tiles + 1), 128))
        n_tiles = pl.cdiv(B, batch_tile)
    b_padded = n_tiles * batch_tile

    # Inner lane-chunk loop bounds activation vreg pressure inside a tile.
    lane_chunk = max(128, 128 * (min(int(lane_chunk), batch_tile) // 128))
    while batch_tile % lane_chunk != 0:
        lane_chunk -= 128
    n_chunks = batch_tile // lane_chunk

    # ---- feature-major input (batch on the 128-lane axis) -------------------
    x_t = jnp.transpose(x)                               # [in_features, B]
    if b_padded != B:
        x_t = jnp.pad(x_t, ((0, 0), (0, b_padded - B)))  # padded cols discarded below

    w_packed, b_packed, layer_meta = _pack_params(weights, biases)

    kernel = functools.partial(
        _mlp_kernel,
        layer_meta=layer_meta,
        relu_flags=tuple(bool(r) for r in relu_flags),
        matmul_dtype=matmul_dtype,
        lane_chunk=lane_chunk,
        n_chunks=n_chunks,
    )

    y = pl.pallas_call(
        kernel,
        out_shape=jax.ShapeDtypeStruct((1, b_padded), jnp.float32),
        grid_spec=pltpu.PrefetchScalarGridSpec(
            num_scalar_prefetch=0,
            grid=(n_tiles,),
            in_specs=[
                # lane-dense feature-major input tile
                pl.BlockSpec((in_features, batch_tile), lambda i: (0, i)),
                # packed, grid-constant params: 2 DMA descriptors instead of 2L
                pl.BlockSpec(w_packed.shape, lambda i: (0, 0)),
                pl.BlockSpec(b_packed.shape, lambda i: (0, 0)),
            ],
            out_specs=pl.BlockSpec((1, batch_tile), lambda i: (0, i)),
        ),
        compiler_params=pltpu.CompilerParams(
            dimension_semantics=("parallel",),   # shard batch tiles across TCs on v7x
        ),
    )(x_t, w_packed, b_packed)

    # torch.squeeze removes all size-1 dims: (1, B) -> (B,)  (scalar if B == 1)
    return jnp.squeeze(y[:, :B])


def _init_params(key, in_features, embedding_dimension, hidden_nodes, hidden_depth):
    """Deterministic params mirroring the torch module's layer shapes.

    Layer list (torch [out, in] shapes):
      embed_link            : Linear(in_features, embedding_dimension)
      hidden x hidden_depth : Linear(prev, hidden_nodes) + ReLU
      head                  : Linear(prev, 1)
    """
    dims = [in_features, embedding_dimension] + [hidden_nodes] * hidden_depth + [1]
    relu_flags = [False] + [True] * hidden_depth + [False]

    weights, biases = [], []
    for i in range(len(dims) - 1):
        key, kw, kb = jax.random.split(key, 3)
        bound = 1.0 / np.sqrt(dims[i])
        w = jax.random.uniform(kw, (dims[i + 1], dims[i]), jnp.float32, -bound, bound)
        b = jax.random.uniform(kb, (dims[i + 1],), jnp.float32, -bound, bound)
        weights.append(w)
        biases.append(b)
    return weights, biases, relu_flags


def _reference(x, weights, biases, relu_flags):
    h = x
    for w, b, r in zip(weights, biases, relu_flags):
        h = jnp.dot(h, w.T, precision=jax.lax.Precision.HIGHEST) + b
        if r:
            h = jnp.maximum(h, 0.0)
    return jnp.squeeze(h)


if __name__ == "__main__":
    # Small shapes consistent with the module's forward; batch chosen so the grid
    # has 2 tiles (both v7x TensorCores busy) with 2 lane-chunks per tile.
    batch = 2048
    in_features = 16
    embedding_dimension = 32
    hidden_nodes = 32
    hidden_depth = 2

    key = jax.random.PRNGKey(0)
    key, kx = jax.random.split(key)
    x = jax.random.normal(kx, (batch, in_features), jnp.float32)

    weights, biases, relu_flags = _init_params(
        key, in_features, embedding_dimension, hidden_nodes, hidden_depth
    )

    y = discriminative_embedding_forward(
        x, weights, biases, relu_flags, batch_tile=1024, lane_chunk=512
    )
    y = jax.block_until_ready(y)

    y_ref = _reference(x, weights, biases, relu_flags)
    np.testing.assert_allclose(np.asarray(y), np.asarray(y_ref), rtol=1e-4, atol=1e-4)

    print("KERNEL_OK")
</pallas_src>

<mosaic_0001>
module attributes {stable_mosaic.version = 11 : i64} {
  func.func @_mlp_kernel(%arg0: i32, %arg1: memref<16x1024xf32, #tpu.memory_space<vmem>>, %arg2: memref<128x32xf32, #tpu.memory_space<vmem>>, %arg3: memref<104x1xf32, #tpu.memory_space<vmem>>, %arg4: memref<1x1024xf32, #tpu.memory_space<vmem>>) attributes {dimension_semantics = [#tpu.dimension_semantics<parallel>], iteration_bounds = array<i64: 2>, scalar_prefetch = 0 : i64, scratch_operands = 0 : i64, tpu.core_type = #tpu.core_type<tc>, window_params = [{transform_indices = @transform_0, window_bounds = array<i64: 16, 1024>}, {pipeline_mode = #tpu.pipeline_mode<synchronous>, transform_indices = @transform_1, window_bounds = array<i64: 128, 32>}, {pipeline_mode = #tpu.pipeline_mode<synchronous>, transform_indices = @transform_2, window_bounds = array<i64: 104, 1>}, {transform_indices = @transform_3, window_bounds = array<i64: 1, 1024>}]} {
    %c0_i32 = arith.constant 0 : i32
    %c512_i32 = arith.constant 512 : i32
    %0 = arith.muli %c0_i32, %c512_i32 : i32
    %1 = tpu.assume_multiple %0, 512 : i32
    %c0 = arith.constant 0 : index
    %2 = arith.index_cast %1 : i32 to index
    %3 = vector.load %arg1[%c0, %2] : memref<16x1024xf32, #tpu.memory_space<vmem>>, vector<16x512xf32>
    %c0_0 = arith.constant 0 : index
    %c0_1 = arith.constant 0 : index
    %4 = vector.load %arg2[%c0_0, %c0_1] : memref<128x32xf32, #tpu.memory_space<vmem>>, vector<32x16xf32>
    %c0_2 = arith.constant 0 : index
    %c0_3 = arith.constant 0 : index
    %5 = vector.load %arg3[%c0_2, %c0_3] : memref<104x1xf32, #tpu.memory_space<vmem>>, vector<32x1xf32>
    %cst = arith.constant dense<0.000000e+00> : vector<32x512xf32>
    %6 = tpu.matmul %4, %3, %cst {dimension_numbers = #tpu.dot_dimension_numbers<[1], [0], [0], [1], [0, 0, 1, 1], [], []>} : vector<32x16xf32>, vector<16x512xf32>, vector<32x512xf32> -> vector<32x512xf32>
    %7 = vector.broadcast %5 : vector<32x1xf32> to vector<32x512xf32>
    %8 = arith.addf %6, %7 : vector<32x512xf32>
    %c32 = arith.constant 32 : index
    %c0_4 = arith.constant 0 : index
    %9 = vector.load %arg2[%c32, %c0_4] : memref<128x32xf32, #tpu.memory_space<vmem>>, vector<32x32xf32>
    %c32_5 = arith.constant 32 : index
    %c0_6 = arith.constant 0 : index
    %10 = vector.load %arg3[%c32_5, %c0_6] : memref<104x1xf32, #tpu.memory_space<vmem>>, vector<32x1xf32>
    %cst_7 = arith.constant dense<0.000000e+00> : vector<32x512xf32>
    %11 = tpu.matmul %9, %8, %cst_7 {dimension_numbers = #tpu.dot_dimension_numbers<[1], [0], [0], [1], [0, 0, 1, 1], [], []>} : vector<32x32xf32>, vector<32x512xf32>, vector<32x512xf32> -> vector<32x512xf32>
    %12 = vector.broadcast %10 : vector<32x1xf32> to vector<32x512xf32>
    %13 = arith.addf %11, %12 : vector<32x512xf32>
    %cst_8 = arith.constant 0.000000e+00 : f32
    %14 = vector.broadcast %cst_8 : f32 to vector<32x512xf32>
    %15 = arith.maximumf %13, %14 : vector<32x512xf32>
    %c64 = arith.constant 64 : index
    %c0_9 = arith.constant 0 : index
    %16 = vector.load %arg2[%c64, %c0_9] : memref<128x32xf32, #tpu.memory_space<vmem>>, vector<32x32xf32>
    %c64_10 = arith.constant 64 : index
    %c0_11 = arith.constant 0 : index
    %17 = vector.load %arg3[%c64_10, %c0_11] : memref<104x1xf32, #tpu.memory_space<vmem>>, vector<32x1xf32>
    %cst_12 = arith.constant dense<0.000000e+00> : vector<32x512xf32>
    %18 = tpu.matmul %16, %15, %cst_12 {dimension_numbers = #tpu.dot_dimension_numbers<[1], [0], [0], [1], [0, 0, 1, 1], [], []>} : vector<32x32xf32>, vector<32x512xf32>, vector<32x512xf32> -> vector<32x512xf32>
    %19 = vector.broadcast %17 : vector<32x1xf32> to vector<32x512xf32>
    %20 = arith.addf %18, %19 : vector<32x512xf32>
    %cst_13 = arith.constant 0.000000e+00 : f32
    %21 = vector.broadcast %cst_13 : f32 to vector<32x512xf32>
    %22 = arith.maximumf %20, %21 : vector<32x512xf32>
    %c96 = arith.constant 96 : index
    %c0_14 = arith.constant 0 : index
    %23 = vector.load %arg2[%c96, %c0_14] : memref<128x32xf32, #tpu.memory_space<vmem>>, vector<32x1xf32>
    %c96_15 = arith.constant 96 : index
    %c0_16 = arith.constant 0 : index
    %24 = vector.load %arg3[%c96_15, %c0_16] : memref<104x1xf32, #tpu.memory_space<vmem>>, vector<1x1xf32>
    %25 = vector.broadcast %23 : vector<32x1xf32> to vector<32x512xf32>
    %26 = arith.mulf %22, %25 : vector<32x512xf32>
    %cst_17 = arith.constant dense<0.000000e+00> : vector<512xf32>
    %27 = vector.multi_reduction <add>, %26, %cst_17 [0] : vector<32x512xf32> to vector<512xf32>
    %28 = vector.shape_cast %27 : vector<512xf32> to vector<1x512xf32>
    %29 = vector.broadcast %24 : vector<1x1xf32> to vector<1x512xf32>
    %30 = arith.addf %28, %29 : vector<1x512xf32>
    %c0_18 = arith.constant 0 : index
    %31 = arith.index_cast %1 : i32 to index
    %32 = vector.load %arg4[%c0_18, %31] : memref<1x1024xf32, #tpu.memory_space<vmem>>, vector<1x512xf32>
    tpu.vector_store %arg4[%c0_18, %31], %30 {strides = array<i32>} : memref<1x1024xf32, #tpu.memory_space<vmem>>, vector<1x512xf32>,
    %c1_i32 = arith.constant 1 : i32
    %c512_i32_19 = arith.constant 512 : i32
    %33 = arith.muli %c1_i32, %c512_i32_19 : i32
    %34 = tpu.assume_multiple %33, 512 : i32
    %c0_20 = arith.constant 0 : index
    %35 = arith.index_cast %34 : i32 to index
    %36 = vector.load %arg1[%c0_20, %35] : memref<16x1024xf32, #tpu.memory_space<vmem>>, vector<16x512xf32>
    %c0_21 = arith.constant 0 : index
    %c0_22 = arith.constant 0 : index
    %37 = vector.load %arg2[%c0_21, %c0_22] : memref<128x32xf32, #tpu.memory_space<vmem>>, vector<32x16xf32>
    %c0_23 = arith.constant 0 : index
    %c0_24 = arith.constant 0 : index
    %38 = vector.load %arg3[%c0_23, %c0_24] : memref<104x1xf32, #tpu.memory_space<vmem>>, vector<32x1xf32>
    %cst_25 = arith.constant dense<0.000000e+00> : vector<32x512xf32>
    %39 = tpu.matmul %37, %36, %cst_25 {dimension_numbers = #tpu.dot_dimension_numbers<[1], [0], [0], [1], [0, 0, 1, 1], [], []>} : vector<32x16xf32>, vector<16x512xf32>, vector<32x512xf32> -> vector<32x512xf32>
    %40 = vector.broadcast %38 : vector<32x1xf32> to vector<32x512xf32>
    %41 = arith.addf %39, %40 : vector<32x512xf32>
    %c32_26 = arith.constant 32 : index
    %c0_27 = arith.constant 0 : index
    %42 = vector.load %arg2[%c32_26, %c0_27] : memref<128x32xf32, #tpu.memory_space<vmem>>, vector<32x32xf32>
    %c32_28 = arith.constant 32 : index
    %c0_29 = arith.constant 0 : index
    %43 = vector.load %arg3[%c32_28, %c0_29] : memref<104x1xf32, #tpu.memory_space<vmem>>, vector<32x1xf32>
    %cst_30 = arith.constant dense<0.000000e+00> : vector<32x512xf32>
    %44 = tpu.matmul %42, %41, %cst_30 {dimension_numbers = #tpu.dot_dimension_numbers<[1], [0], [0], [1], [0, 0, 1, 1], [], []>} : vector<32x32xf32>, vector<32x512xf32>, vector<32x512xf32> -> vector<32x512xf32>
    %45 = vector.broadcast %43 : vector<32x1xf32> to vector<32x512xf32>
    %46 = arith.addf %44, %45 : vector<32x512xf32>
    %cst_31 = arith.constant 0.000000e+00 : f32
    %47 = vector.broadcast %cst_31 : f32 to vector<32x512xf32>
    %48 = arith.maximumf %46, %47 : vector<32x512xf32>
    %c64_32 = arith.constant 64 : index
    %c0_33 = arith.constant 0 : index
    %49 = vector.load %arg2[%c64_32, %c0_33] : memref<128x32xf32, #tpu.memory_space<vmem>>, vector<32x32xf32>
    %c64_34 = arith.constant 64 : index
    %c0_35 = arith.constant 0 : index
    %50 = vector.load %arg3[%c64_34, %c0_35] : memref<104x1xf32, #tpu.memory_space<vmem>>, vector<32x1xf32>
    %cst_36 = arith.constant dense<0.000000e+00> : vector<32x512xf32>
    %51 = tpu.matmul %49, %48, %cst_36 {dimension_numbers = #tpu.dot_dimension_numbers<[1], [0], [0], [1], [0, 0, 1, 1], [], []>} : vector<32x32xf32>, vector<32x512xf32>, vector<32x512xf32> -> vector<32x512xf32>
    %52 = vector.broadcast %50 : vector<32x1xf32> to vector<32x512xf32>
    %53 = arith.addf %51, %52 : vector<32x512xf32>
    %cst_37 = arith.constant 0.000000e+00 : f32
    %54 = vector.broadcast %cst_37 : f32 to vector<32x512xf32>
    %55 = arith.maximumf %53, %54 : vector<32x512xf32>
    %c96_38 = arith.constant 96 : index
    %c0_39 = arith.constant 0 : index
    %56 = vector.load %arg2[%c96_38, %c0_39] : memref<128x32xf32, #tpu.memory_space<vmem>>, vector<32x1xf32>
    %c96_40 = arith.constant 96 : index
    %c0_41 = arith.constant 0 : index
    %57 = vector.load %arg3[%c96_40, %c0_41] : memref<104x1xf32, #tpu.memory_space<vmem>>, vector<1x1xf32>
    %58 = vector.broadcast %56 : vector<32x1xf32> to vector<32x512xf32>
    %59 = arith.mulf %55, %58 : vector<32x512xf32>
    %cst_42 = arith.constant dense<0.000000e+00> : vector<512xf32>
    %60 = vector.multi_reduction <add>, %59, %cst_42 [0] : vector<32x512xf32> to vector<512xf32>
    %61 = vector.shape_cast %60 : vector<512xf32> to vector<1x512xf32>
    %62 = vector.broadcast %57 : vector<1x1xf32> to vector<1x512xf32>
    %63 = arith.addf %61, %62 : vector<1x512xf32>
    %c0_43 = arith.constant 0 : index
    %64 = arith.index_cast %34 : i32 to index
    %65 = vector.load %arg4[%c0_43, %64] : memref<1x1024xf32, #tpu.memory_space<vmem>>, vector<1x512xf32>
    tpu.vector_store %arg4[%c0_43, %64], %63 {strides = array<i32>} : memref<1x1024xf32, #tpu.memory_space<vmem>>, vector<1x512xf32>,
    %c2_i32 = arith.constant 2 : i32
    return
  }
  func.func @transform_0(%arg0: i32) -> (i32, i32) {
    %c0_i32 = arith.constant 0 : i32
    %c0_i32_0 = arith.constant 0 : i32
    return %c0_i32, %arg0 : i32, i32
  }
  func.func @transform_1(%arg0: i32) -> (i32, i32) {
    %c0_i32 = arith.constant 0 : i32
    %c0_i32_0 = arith.constant 0 : i32
    %c0_i32_1 = arith.constant 0 : i32
    return %c0_i32, %c0_i32_0 : i32, i32
  }
  func.func @transform_2(%arg0: i32) -> (i32, i32) {
    %c0_i32 = arith.constant 0 : i32
    %c0_i32_0 = arith.constant 0 : i32
    %c0_i32_1 = arith.constant 0 : i32
    return %c0_i32, %c0_i32_0 : i32, i32
  }
  func.func @transform_3(%arg0: i32) -> (i32, i32) {
    %c0_i32 = arith.constant 0 : i32
    %c0_i32_0 = arith.constant 0 : i32
    return %c0_i32, %arg0 : i32, i32
  }
}

</mosaic_0001>

<llo_original>
// kernel: tpu_custom_call.1
$region0: #{tpu_custom_call.1}
  #allocation0 [shape = 'u32[]', space=smem, size = 0x4, offset = 0x4, fixed_abs, tag = 'smem constant byte address 0x4 - core index']
  #allocation1 [shape = 'u32[144,128]{1,0:T(1,128)}', space=vmem, size = 0x12000, scoped, tag = 'internal scratch']
  %s0 = inlined_call_operand.vmem [shape: f32[16,2048], index: 0, kind: input, shape index: {}]
  %s1 = inlined_call_operand.vmem [shape: f32[128,32], index: 1, kind: input, shape index: {}]
  %s2 = inlined_call_operand.vmem [shape: f32[104,1], index: 2, kind: input, shape index: {}]
  %s3 = inlined_call_operand.hbm [shape: f32[1,2048], index: 3, kind: output, shape index: {}]
  %s4 = sld [smem:[#allocation0]]
  $region68: #{tpu_custom_call.1} parent=0
    _
  %s6 = ssub.s32 1, %s4
  %s7 = scalar_select 0, %s6, %s4
  $region1: #{tpu_custom_call.1} parent=0
    #allocation2 [shape = 'u8[131072]{0}', space=vmem, size = 0x20000, scoped, tag = 'input window, operand 0']
    #allocation3 [shape = 'u8[8192]{0}', space=vmem, size = 0x2000, scoped, tag = 'output window, operand 0']
    #allocation4 [shape = 's32[2]{0}', space=sflag, size = 0x8, scoped, tag = 'scoped memory for tpu_custom_call.1']
    %8 = vsyncpa [#allocation4], 0
    %s9 = scalar_lea.sflag [#allocation4], 1
    %10 = vsyncpa %s9, 0
    loop: start=0, step=1, limit=4
    $region2: #{tpu_custom_call.1} parent=1 // loop_pre_header
      _
    $region3: #{tpu_custom_call.1} parent=1 // loop_header
      %s12 = sphi 0, %s16
      %p13 = scmp.ge.s32.totalorder %s12, 4
      %s22 = sphi 0, %s24
      %s25 = sphi 0, %s22
      %s26 = sphi 0, %s25
      %s42 = sphi 0, %s26
      %s46 = sphi 0, %s46
      %s48 = sphi 0, %s46
      %s49 = sphi 0, %s48
      %s63 = sphi 0, %s49
      %s67 = sphi 0, %s67
      %s69 = sphi 0, %s67
      %s70 = sphi 0, %s69
      %s84 = sphi 0, %s70
      %s90 = sphi 0, %s92
      %s93 = sphi 0, %s90
      %s94 = sphi 0, %s93
      %s110 = sphi 0, %s94
    $region4: #{tpu_custom_call.1} parent=1 // loop_header_branch
      %15 = sbr.rel (%p13) target = $region8
    $region5: #{tpu_custom_call.1} parent=1 // loop_body
      %s17 = ssub.s32 %s12, 1
      %s18 = ssub.s32 %s12, 2
      %s19 = sadd.s32 %s12, 1
      %s20 = ssub.s32 %s12, %s19
      %p21 = scmp.eq.s32.totalorder %s20, 0
      %s23 = sadd.s32 %s22, 1
      %s24 = scalar_select %p21, %s22, %s23
      %p27 = pneg %p21
      %p28 = scmp.eq.s32.totalorder %s12, 1
      %p29 = por %p27, %p28
      %p30 = scmp.ne.s32.totalorder %s22, %s25
      %p31 = scmp.eq.s32.totalorder %s12, 0
      %p32 = por %p30, %p31
      %p33 = scmp.ne.s32.totalorder %s22, %s25
      %p34 = scmp.eq.s32.totalorder %s17, 1
      %p35 = por %p33, %p34
      %p36 = scmp.ne.s32.totalorder %s25, %s26
      %p37 = scmp.eq.s32.totalorder %s17, 0
      %p38 = por %p36, %p37
      %p39 = scmp.ne.s32.totalorder %s25, %s26
      %p40 = scmp.eq.s32.totalorder %s18, 1
      %p41 = por %p39, %p40
      %p43 = scmp.ne.s32.totalorder %s26, %s42
      %p44 = scmp.eq.s32.totalorder %s18, 0
      %p45 = por %p43, %p44
      %s47 = sadd.s32 %s46, 1
      %p50 = scmp.eq.s32.totalorder %s12, 1
      %p51 = scmp.ne.s32.totalorder %s46, %s48
      %p52 = scmp.eq.s32.totalorder %s12, 0
      %p53 = por %p51, %p52
      %p54 = scmp.ne.s32.totalorder %s46, %s48
      %p55 = scmp.eq.s32.totalorder %s17, 1
      %p56 = por %p54, %p55
      %p57 = scmp.ne.s32.totalorder %s48, %s49
      %p58 = scmp.eq.s32.totalorder %s17, 0
      %p59 = por %p57, %p58
      %p60 = scmp.ne.s32.totalorder %s48, %s49
      %p61 = scmp.eq.s32.totalorder %s18, 1
      %p62 = por %p60, %p61
      %p64 = scmp.ne.s32.totalorder %s49, %s63
      %p65 = scmp.eq.s32.totalorder %s18, 0
      %p66 = por %p64, %p65
      %s68 = sadd.s32 %s67, 1
      %p71 = scmp.eq.s32.totalorder %s12, 1
      %p72 = scmp.ne.s32.totalorder %s67, %s69
      %p73 = scmp.eq.s32.totalorder %s12, 0
      %p74 = por %p72, %p73
      %p75 = scmp.ne.s32.totalorder %s67, %s69
      %p76 = scmp.eq.s32.totalorder %s17, 1
      %p77 = por %p75, %p76
      %p78 = scmp.ne.s32.totalorder %s69, %s70
      %p79 = scmp.eq.s32.totalorder %s17, 0
      %p80 = por %p78, %p79
      %p81 = scmp.ne.s32.totalorder %s69, %s70
      %p82 = scmp.eq.s32.totalorder %s18, 1
      %p83 = por %p81, %p82
      %p85 = scmp.ne.s32.totalorder %s70, %s84
      %p86 = scmp.eq.s32.totalorder %s18, 0
      %p87 = por %p85, %p86
      %s88 = ssub.s32 %s12, %s19
      %p89 = scmp.eq.s32.totalorder %s88, 0
      %s91 = sadd.s32 %s90, 1
      %s92 = scalar_select %p89, %s90, %s91
      %p95 = pneg %p89
      %p96 = scmp.eq.s32.totalorder %s12, 1
      %p97 = por %p95, %p96
      %p98 = scmp.ne.s32.totalorder %s90, %s93
      %p99 = scmp.eq.s32.totalorder %s12, 0
      %p100 = por %p98, %p99
      %p101 = scmp.ne.s32.totalorder %s90, %s93
      %p102 = scmp.eq.s32.totalorder %s17, 1
      %p103 = por %p101, %p102
      %p104 = scmp.ne.s32.totalorder %s93, %s94
      %p105 = scmp.eq.s32.totalorder %s17, 0
      %p106 = por %p104, %p105
      %p107 = scmp.ne.s32.totalorder %s93, %s94
      %p108 = scmp.eq.s32.totalorder %s18, 1
      %p109 = por %p107, %p108
      %p111 = scmp.ne.s32.totalorder %s94, %s110
      %p112 = scmp.eq.s32.totalorder %s18, 0
      %p113 = por %p111, %p112
      %p114 = scmp.le.s32.totalorder 1, %s12
      %p115 = scmp.lt.s32.totalorder %s12, 3
      %p116 = pnand %p114, %p115
      %p117 = pneg %p116
      // Predicated region
      $region9: #{tpu_custom_call.1} parent=5 // pred_check
        _
      $region10: #{tpu_custom_call.1} parent=5 // pred_check_branch
        %119 = sbr.rel (%p116) target = $region12
      $region11: #{tpu_custom_call.1} parent=5 // pred_region
        %s120 = ssub.s32 %s12, 1
        // Predicated region
        $region13: #{tpu_custom_call.1} parent=11 // pred_check
          %p121 = pneg %p59
        $region14: #{tpu_custom_call.1} parent=11 // pred_check_branch
          %123 = sbr.rel (%p121) target = $region16
        $region15: #{tpu_custom_call.1} parent=11 // pred_region
          _
        $region16: #{tpu_custom_call.1} parent=11 // pred_fallthru
          _
        // Predicated region
        $region17: #{tpu_custom_call.1} parent=11 // pred_check
          %p124 = pneg %p80
        $region18: #{tpu_custom_call.1} parent=11 // pred_check_branch
          %126 = sbr.rel (%p124) target = $region20
        $region19: #{tpu_custom_call.1} parent=11 // pred_region
          _
        $region20: #{tpu_custom_call.1} parent=11 // pred_fallthru
          _
      $region12: #{tpu_custom_call.1} parent=5 // pred_fallthru
        _
      %p127 = scmp.lt.s32.totalorder %s12, 2
      // Predicated region
      $region21: #{tpu_custom_call.1} parent=5 // pred_check
        %p128 = pneg %p127
      $region22: #{tpu_custom_call.1} parent=5 // pred_check_branch
        %130 = sbr.rel (%p128) target = $region24
      $region23: #{tpu_custom_call.1} parent=5 // pred_region
        // Predicated region
        $region25: #{tpu_custom_call.1} parent=23 // pred_check
          %p131 = pneg %p32
        $region26: #{tpu_custom_call.1} parent=23 // pred_check_branch
          %133 = sbr.rel (%p131) target = $region28
        $region27: #{tpu_custom_call.1} parent=23 // pred_region
          %s134 = sand.u32 %s22, 1
          %s135 = sand.u32 %s22, 1
          %s136 = smul.addr %s135, 128
          %s137 = scalar_lea.vmem [#allocation2], %s136
          %s138 = smul.u32 8, %s12
          %s139 = smul.addr %s138, 8
          %s140 = scalar_lea.vmem %s0, %s139
          // Predicated region
          $region29: #{tpu_custom_call.1} parent=27 // pred_check
            _
          $region30: #{tpu_custom_call.1} parent=27 // pred_check_branch
            %142 = sbr.rel (0) target = $region32
          $region31: #{tpu_custom_call.1} parent=27 // pred_region
            // Predicated region
            $region33: #{tpu_custom_call.1} parent=31 // pred_check
              _
            $region34: #{tpu_custom_call.1} parent=31 // pred_check_branch
              %144 = sbr.rel (0) target = $region36
            $region35: #{tpu_custom_call.1} parent=31 // pred_region
              loop: start=0, step=1, limit=1
              $region37: #{tpu_custom_call.1} parent=35 // loop_pre_header
                _
              $region38: #{tpu_custom_call.1} parent=35 // loop_header
                %s146 = sphi 0, %s150
                %p147 = scmp.ge.s32.totalorder %s146, 1
                %s151 = sphi %s140, %s140
                %s152 = sphi %s137, %s137
              $region39: #{tpu_custom_call.1} parent=35 // loop_header_branch
                %149 = sbr.rel (%p147) target = $region43
              $region40: #{tpu_custom_call.1} parent=35 // loop_body
                %v153 = vld [vmem:[%s151] sm:$0xff]
                %154 = vst [vmem:[%s152] sm:$0xff] %v153
                %v155 = vld [vmem:[%s151 + $0x8] sm:$0xff]
                %156 = vst [vmem:[%s152 + $0x8] sm:$0xff] %v155
                %v157 = vld [vmem:[%s151 + $0x10] sm:$0xff]
                %158 = vst [vmem:[%s152 + $0x10] sm:$0xff] %v157
                %v159 = vld [vmem:[%s151 + $0x18] sm:$0xff]
                %160 = vst [vmem:[%s152 + $0x18] sm:$0xff] %v159
                %v161 = vld [vmem:[%s151 + $0x20] sm:$0xff]
                %162 = vst [vmem:[%s152 + $0x20] sm:$0xff] %v161
                %v163 = vld [vmem:[%s151 + $0x28] sm:$0xff]
                %164 = vst [vmem:[%s152 + $0x28] sm:$0xff] %v163
                %v165 = vld [vmem:[%s151 + $0x30] sm:$0xff]
                %166 = vst [vmem:[%s152 + $0x30] sm:$0xff] %v165
                %v167 = vld [vmem:[%s151 + $0x38] sm:$0xff]
                %168 = vst [vmem:[%s152 + $0x38] sm:$0xff] %v167
                %v169 = vld [vmem:[%s151 + $0x80] sm:$0xff]
                %170 = vst [vmem:[%s152 + $0x40] sm:$0xff] %v169
                %v171 = vld [vmem:[%s151 + $0x88] sm:$0xff]
                %172 = vst [vmem:[%s152 + $0x48] sm:$0xff] %v171
                %v173 = vld [vmem:[%s151 + $0x90] sm:$0xff]
                %174 = vst [vmem:[%s152 + $0x50] sm:$0xff] %v173
                %v175 = vld [vmem:[%s151 + $0x98] sm:$0xff]
                %176 = vst [vmem:[%s152 + $0x58] sm:$0xff] %v175
                %v177 = vld [vmem:[%s151 + $0xa0] sm:$0xff]
                %178 = vst [vmem:[%s152 + $0x60] sm:$0xff] %v177
                %v179 = vld [vmem:[%s151 + $0xa8] sm:$0xff]
                %180 = vst [vmem:[%s152 + $0x68] sm:$0xff] %v179
                %v181 = vld [vmem:[%s151 + $0xb0] sm:$0xff]
                %182 = vst [vmem:[%s152 + $0x70] sm:$0xff] %v181
                %v183 = vld [vmem:[%s151 + $0xb8] sm:$0xff]
                %184 = vst [vmem:[%s152 + $0x78] sm:$0xff] %v183
              $region41: #{tpu_custom_call.1} parent=35 // loop_footer
                %s150 = sadd.s32 1, %s146
              $region42: #{tpu_custom_call.1} parent=35 // loop_footer_branch
                %145 = sbr.rel target = $region38
              $region43: #{tpu_custom_call.1} parent=35 // loop_exit
                _
            $region36: #{tpu_custom_call.1} parent=31 // pred_fallthru
              _
            // Predicated region
            $region44: #{tpu_custom_call.1} parent=31 // pred_check
              _
            $region45: #{tpu_custom_call.1} parent=31 // pred_check_branch
              %186 = sbr.rel target = $region47
            $region46: #{tpu_custom_call.1} parent=31 // pred_region
              _
            $region47: #{tpu_custom_call.1} parent=31 // pred_fallthru
              _
          $region32: #{tpu_custom_call.1} parent=27 // pred_fallthru
            _
          %187 = vnop
        $region28: #{tpu_custom_call.1} parent=23 // pred_fallthru
          _
      $region24: #{tpu_custom_call.1} parent=5 // pred_fallthru
        _
      %p188 = scmp.le.s32.totalorder 1, %s12
      %p189 = scmp.lt.s32.totalorder %s12, 3
      %p190 = pnand %p188, %p189
      %p191 = pneg %p190
      // Predicated region
      $region48: #{tpu_custom_call.1} parent=5 // pred_check
        _
      $region49: #{tpu_custom_call.1} parent=5 // pred_check_branch
        %193 = sbr.rel (%p190) target = $region51
      $region50: #{tpu_custom_call.1} parent=5 // pred_region
        %s194 = ssub.s32 %s12, 1
        %s195 = sand.u32 %s25, 1
        %s196 = sand.u32 %s25, 1
        %s197 = smul.addr %s196, 128
        %s198 = scalar_lea.vmem [#allocation2], %s197
        // Predicated region
        $region52: #{tpu_custom_call.1} parent=50 // pred_check
          %p199 = pneg %p38
        $region53: #{tpu_custom_call.1} parent=50 // pred_check_branch
          %201 = sbr.rel (%p199) target = $region55
        $region54: #{tpu_custom_call.1} parent=50 // pred_region
          _
        $region55: #{tpu_custom_call.1} parent=50 // pred_fallthru
          _
        %s202 = sand.u32 %s25, 1
        %s203 = sand.u32 %s25, 1
        %s204 = smul.addr %s203, 128
        %s205 = scalar_lea.vmem [#allocation2], %s204
        %p206 = pneg %p38
        %p207 = pneg %p35
        %p208 = pneg %p59
        %p209 = pneg %p56
        %p210 = pneg %p80
        %p211 = pneg %p77
        %p212 = pneg %p106
        %p213 = pneg %p103
        %s214 = sand.u32 %s93, 1
        %s215 = scalar_lea.sflag [#allocation4], %s214
        %s216 = sand.u32 %s93, 1
        %s217 = smul.addr %s216, 8
        %s218 = scalar_lea.vmem [#allocation3], %s217
        %s219 = smul.u32 8, %s17
        %s220 = smul.u32 8, %s17
        %v221 = vld [vmem:[%s198] sm:$0xff]
        %v222 = vld [vmem:[%s198 + $0x8] sm:$0xff]
        %v223 = vld [vmem:[%s198 + $0x10] sm:$0xff]
        %v224 = vld [vmem:[%s198 + $0x18] sm:$0xff]
        %v225 = vld [vmem:[%s198 + $0x40] sm:$0xff]
        %v226 = vld [vmem:[%s198 + $0x48] sm:$0xff]
        %v227 = vld [vmem:[%s198 + $0x50] sm:$0xff]
        %v228 = vld [vmem:[%s198 + $0x58] sm:$0xff]
        %v229 = vld [vmem:[%s1] sm:$0xff]
        %v230 = vld [vmem:[%s1 + $0x8] sm:$0xff]
        %v231 = vld [vmem:[%s1 + $0x10] sm:$0xff]
        %v232 = vld [vmem:[%s1 + $0x18] sm:$0xff]
        %v233 = vld [vmem:[%s2] sm:$0xff]
        %v234 = vld [vmem:[%s2 + $0x8] sm:$0xff]
        %v235 = vld [vmem:[%s2 + $0x10] sm:$0xff]
        %v236 = vld [vmem:[%s2 + $0x18] sm:$0xff]
        %238 = vset.pattern.permute.xlu0 0
        %239 = vperm.xlu0 %238, %v233
        %v240 = vpop.permute.xlu0 %239
        %243 = vset.pattern.permute.xlu0 0
        %244 = vperm.xlu0 %243, %v234
        %v245 = vpop.permute.xlu0 %244
        %248 = vset.pattern.permute.xlu0 0
        %249 = vperm.xlu0 %248, %v235
        %v250 = vpop.permute.xlu0 %249
        %253 = vset.pattern.permute.xlu0 0
        %254 = vperm.xlu0 %253, %v236
        %v255 = vpop.permute.xlu0 %254
        %vm257 = vcmask 130048
        %v259 = vsel %vm257, %v229, 0
        %v262 = vsel %vm257, %v230, 0
        %v265 = vsel %vm257, %v231, 0
        %v268 = vsel %vm257, %v232, 0
        %270 = vmatprep.subr.mxu0 %v222
        %271 = vmatpush1.msra.mxu0 %v221
        %272 = vmatprep.subr.mxu0 %v226
        %273 = vmatpush1.msra.mxu0 %v225
        %274 = vmatprep.subr.mxu0 0.0
        %275 = vmatpush1.msra.mxu0 0.0
        %276 = vmatprep.subr.mxu0 0.0
        %277 = vmatpush1.msra.mxu0 0.0
        %278 = vmatprep.subr.mxu0 0.0
        %279 = vmatpush1.msra.mxu0 0.0
        %280 = vmatprep.subr.mxu0 0.0
        %281 = vmatpush1.msra.mxu0 0.0
        %282 = vmatprep.subr.mxu0 0.0
        %283 = vmatpush1.msra.mxu0 0.0
        %284 = vmatprep.subr.mxu0 0.0
        %285 = vmatpush1.msra.mxu0 0.0
        %286 = vmatprep.subr.mxu0 0.0
        %287 = vmatpush1.msra.mxu0 0.0
        %288 = vmatprep.subr.mxu0 0.0
        %289 = vmatpush1.msra.mxu0 0.0
        %290 = vmatprep.subr.mxu0 0.0
        %291 = vmatpush1.msra.mxu0 0.0
        %292 = vmatprep.subr.mxu0 0.0
        %293 = vmatpush1.msra.mxu0 0.0
        %294 = vmatprep.subr.mxu0 0.0
        %295 = vmatpush1.msra.mxu0 0.0
        %296 = vmatprep.subr.mxu0 0.0
        %297 = vmatpush1.msra.mxu0 0.0
        %298 = vmatprep.subr.mxu0 0.0
        %299 = vmatpush1.msra.mxu0 0.0
        %300 = vmatprep.subr.mxu0 0.0
        %301 = vmatpush1.msra.mxu0 0.0
        %302 = vmatprep.subr.mxu0 0.0
        %303 = vmatpush1.msra.mxu0 0.0
        %304 = vmatprep.subr.mxu0 0.0
        %305 = vmatpush1.msra.mxu0 0.0
        %306 = vmatprep.subr.mxu0 0.0
        %307 = vmatpush1.msra.mxu0 0.0
        %308 = vmatprep.subr.mxu0 0.0
        %309 = vmatpush1.msra.mxu0 0.0
        %310 = vmatprep.subr.mxu0 0.0
        %311 = vmatpush1.msra.mxu0 0.0
        %312 = vmatprep.subr.mxu0 0.0
        %313 = vmatpush1.msra.mxu0 0.0
        %314 = vmatprep.subr.mxu0 0.0
        %315 = vmatpush1.msra.mxu0 0.0
        %316 = vmatprep.subr.mxu0 0.0
        %317 = vmatpush1.msra.mxu0 0.0
        %318 = vmatprep.subr.mxu0 0.0
        %319 = vmatpush1.msra.mxu0 0.0
        %320 = vmatprep.subr.mxu0 0.0
        %321 = vmatpush1.msra.mxu0 0.0
        %322 = vmatprep.subr.mxu0 0.0
        %323 = vmatpush1.msra.mxu0 0.0
        %324 = vmatprep.subr.mxu0 0.0
        %325 = vmatpush1.msra.mxu0 0.0
        %326 = vmatprep.subr.mxu0 0.0
        %327 = vmatpush1.msra.mxu0 0.0
        %328 = vmatprep.subr.mxu0 0.0
        %329 = vmatpush1.msra.mxu0 0.0
        %330 = vmatprep.subr.mxu0 0.0
        %331 = vmatpush1.msra.mxu0 0.0
        %332 = vmatprep.subr.mxu0 0.0
        %333 = vmatpush1.msra.mxu0 0.0
        %334 = vmatprep.mubr.f32.mxu0 0.0
        %335 = vmatmul.mubr.f32.gmra.mrb[0].mxu0 %v259
        %v336 = vpop.f32.mrb[0].mxu0
        %v337 = vadd.f32 %v240, %v336
        %v338 = vpop.f32.mrb[0].mxu0
        %v339 = vadd.f32 %v240, %v338
        %340 = vmatprep.mubr.f32.mxu0 0.0
        %341 = vmatmul.mubr.f32.gmra.mrb[0].mxu0 %v262
        %v342 = vpop.f32.mrb[0].mxu0
        %v343 = vadd.f32 %v245, %v342
        %v344 = vpop.f32.mrb[0].mxu0
        %v345 = vadd.f32 %v245, %v344
        %346 = vmatprep.mubr.f32.mxu0 0.0
        %347 = vmatmul.mubr.f32.gmra.mrb[0].mxu0 %v265
        %v348 = vpop.f32.mrb[0].mxu0
        %v349 = vadd.f32 %v250, %v348
        %v350 = vpop.f32.mrb[0].mxu0
        %v351 = vadd.f32 %v250, %v350
        %352 = vmatprep.mubr.f32.mxu0 0.0
        %353 = vmatmul.mubr.f32.gmra.mrb[0].mxu0 %v268
        %v354 = vpop.f32.mrb[0].mxu0
        %v355 = vadd.f32 %v255, %v354
        %v356 = vpop.f32.mrb[0].mxu0
        %v357 = vadd.f32 %v255, %v356
        %358 = vdwg.mxu0
        %359 = vmatprep.subr.mxu0 %v224
        %360 = vmatpush1.msra.mxu0 %v223
        %361 = vmatprep.subr.mxu0 %v228
        %362 = vmatpush1.msra.mxu0 %v227
        %363 = vmatprep.subr.mxu0 0.0
        %364 = vmatpush1.msra.mxu0 0.0
        %365 = vmatprep.subr.mxu0 0.0
        %366 = vmatpush1.msra.mxu0 0.0
        %367 = vmatprep.subr.mxu0 0.0
        %368 = vmatpush1.msra.mxu0 0.0
        %369 = vmatprep.subr.mxu0 0.0
        %370 = vmatpush1.msra.mxu0 0.0
        %371 = vmatprep.subr.mxu0 0.0
        %372 = vmatpush1.msra.mxu0 0.0
        %373 = vmatprep.subr.mxu0 0.0
        %374 = vmatpush1.msra.mxu0 0.0
        %375 = vmatprep.subr.mxu0 0.0
        %376 = vmatpush1.msra.mxu0 0.0
        %377 = vmatprep.subr.mxu0 0.0
        %378 = vmatpush1.msra.mxu0 0.0
        %379 = vmatprep.subr.mxu0 0.0
        %380 = vmatpush1.msra.mxu0 0.0
        %381 = vmatprep.subr.mxu0 0.0
        %382 = vmatpush1.msra.mxu0 0.0
        %383 = vmatprep.subr.mxu0 0.0
        %384 = vmatpush1.msra.mxu0 0.0
        %385 = vmatprep.subr.mxu0 0.0
        %386 = vmatpush1.msra.mxu0 0.0
        %387 = vmatprep.subr.mxu0 0.0
        %388 = vmatpush1.msra.mxu0 0.0
        %389 = vmatprep.subr.mxu0 0.0
        %390 = vmatpush1.msra.mxu0 0.0
        %391 = vmatprep.subr.mxu0 0.0
        %392 = vmatpush1.msra.mxu0 0.0
        %393 = vmatprep.subr.mxu0 0.0
        %394 = vmatpush1.msra.mxu0 0.0
        %395 = vmatprep.subr.mxu0 0.0
        %396 = vmatpush1.msra.mxu0 0.0
        %397 = vmatprep.subr.mxu0 0.0
        %398 = vmatpush1.msra.mxu0 0.0
        %399 = vmatprep.subr.mxu0 0.0
        %400 = vmatpush1.msra.mxu0 0.0
        %401 = vmatprep.subr.mxu0 0.0
        %402 = vmatpush1.msra.mxu0 0.0
        %403 = vmatprep.subr.mxu0 0.0
        %404 = vmatpush1.msra.mxu0 0.0
        %405 = vmatprep.subr.mxu0 0.0
        %406 = vmatpush1.msra.mxu0 0.0
        %407 = vmatprep.subr.mxu0 0.0
        %408 = vmatpush1.msra.mxu0 0.0
        %409 = vmatprep.subr.mxu0 0.0
        %410 = vmatpush1.msra.mxu0 0.0
        %411 = vmatprep.subr.mxu0 0.0
        %412 = vmatpush1.msra.mxu0 0.0
        %413 = vmatprep.subr.mxu0 0.0
        %414 = vmatpush1.msra.mxu0 0.0
        %415 = vmatprep.subr.mxu0 0.0
        %416 = vmatpush1.msra.mxu0 0.0
        %417 = vmatprep.subr.mxu0 0.0
        %418 = vmatpush1.msra.mxu0 0.0
        %419 = vmatprep.subr.mxu0 0.0
        %420 = vmatpush1.msra.mxu0 0.0
        %421 = vmatprep.subr.mxu0 0.0
        %422 = vmatpush1.msra.mxu0 0.0
        %423 = vmatprep.mubr.f32.mxu0 0.0
        %424 = vmatmul.mubr.f32.gmra.mrb[0].mxu0 %v259
        %v425 = vpop.f32.mrb[0].mxu0
        %v426 = vadd.f32 %v240, %v425
        %v427 = vpop.f32.mrb[0].mxu0
        %v428 = vadd.f32 %v240, %v427
        %429 = vmatprep.mubr.f32.mxu0 0.0
        %430 = vmatmul.mubr.f32.gmra.mrb[0].mxu0 %v262
        %v431 = vpop.f32.mrb[0].mxu0
        %v432 = vadd.f32 %v245, %v431
        %v433 = vpop.f32.mrb[0].mxu0
        %v434 = vadd.f32 %v245, %v433
        %435 = vmatprep.mubr.f32.mxu0 0.0
        %436 = vmatmul.mubr.f32.gmra.mrb[0].mxu0 %v265
        %v437 = vpop.f32.mrb[0].mxu0
        %v438 = vadd.f32 %v250, %v437
        %v439 = vpop.f32.mrb[0].mxu0
        %v440 = vadd.f32 %v250, %v439
        %441 = vmatprep.mubr.f32.mxu0 0.0
        %442 = vmatmul.mubr.f32.gmra.mrb[0].mxu0 %v268
        %v443 = vpop.f32.mrb[0].mxu0
        %v444 = vadd.f32 %v255, %v443
        %v445 = vpop.f32.mrb[0].mxu0
        %v446 = vadd.f32 %v255, %v445
        %447 = vdwg.mxu0
        %v448 = vld [vmem:[%s1 + $0x20] sm:$0xff]
        %v449 = vld [vmem:[%s1 + $0x28] sm:$0xff]
        %v450 = vld [vmem:[%s1 + $0x30] sm:$0xff]
        %v451 = vld [vmem:[%s1 + $0x38] sm:$0xff]
        %v452 = vld [vmem:[%s2 + $0x20] sm:$0xff]
        %v453 = vld [vmem:[%s2 + $0x28] sm:$0xff]
        %v454 = vld [vmem:[%s2 + $0x30] sm:$0xff]
        %v455 = vld [vmem:[%s2 + $0x38] sm:$0xff]
        %457 = vset.pattern.permute.xlu0 0
        %458 = vperm.xlu0 %457, %v452
        %v459 = vpop.permute.xlu0 %458
        %462 = vset.pattern.permute.xlu0 0
        %463 = vperm.xlu0 %462, %v453
        %v464 = vpop.permute.xlu0 %463
        %467 = vset.pattern.permute.xlu0 0
        %468 = vperm.xlu0 %467, %v454
        %v469 = vpop.permute.xlu0 %468
        %472 = vset.pattern.permute.xlu0 0
        %473 = vperm.xlu0 %472, %v455
        %v474 = vpop.permute.xlu0 %473
        %vm476 = vcmask 261120
        %v478 = vsel %vm476, %v448, 0
        %v481 = vsel %vm476, %v449, 0
        %v484 = vsel %vm476, %v450, 0
        %v487 = vsel %vm476, %v451, 0
        %489 = vmatprep.subr.mxu0 %v339
        %490 = vmatpush1.msra.mxu0 %v337
        %491 = vmatprep.subr.mxu0 %v345
        %492 = vmatpush1.msra.mxu0 %v343
        %493 = vmatprep.subr.mxu0 %v351
        %494 = vmatpush1.msra.mxu0 %v349
        %495 = vmatprep.subr.mxu0 %v357
        %496 = vmatpush1.msra.mxu0 %v355
        %497 = vmatprep.subr.mxu0 0.0
        %498 = vmatpush1.msra.mxu0 0.0
        %499 = vmatprep.subr.mxu0 0.0
        %500 = vmatpush1.msra.mxu0 0.0
        %501 = vmatprep.subr.mxu0 0.0
        %502 = vmatpush1.msra.mxu0 0.0
        %503 = vmatprep.subr.mxu0 0.0
        %504 = vmatpush1.msra.mxu0 0.0
        %505 = vmatprep.subr.mxu0 0.0
        %506 = vmatpush1.msra.mxu0 0.0
        %507 = vmatprep.subr.mxu0 0.0
        %508 = vmatpush1.msra.mxu0 0.0
        %509 = vmatprep.subr.mxu0 0.0
        %510 = vmatpush1.msra.mxu0 0.0
        %511 = vmatprep.subr.mxu0 0.0
        %512 = vmatpush1.msra.mxu0 0.0
        %513 = vmatprep.subr.mxu0 0.0
        %514 = vmatpush1.msra.mxu0 0.0
        %515 = vmatprep.subr.mxu0 0.0
        %516 = vmatpush1.msra.mxu0 0.0
        %517 = vmatprep.subr.mxu0 0.0
        %518 = vmatpush1.msra.mxu0 0.0
        %519 = vmatprep.subr.mxu0 0.0
        %520 = vmatpush1.msra.mxu0 0.0
        %521 = vmatprep.subr.mxu0 0.0
        %522 = vmatpush1.msra.mxu0 0.0
        %523 = vmatprep.subr.mxu0 0.0
        %524 = vmatpush1.msra.mxu0 0.0
        %525 = vmatprep.subr.mxu0 0.0
        %526 = vmatpush1.msra.mxu0 0.0
        %527 = vmatprep.subr.mxu0 0.0
        %528 = vmatpush1.msra.mxu0 0.0
        %529 = vmatprep.subr.mxu0 0.0
        %530 = vmatpush1.msra.mxu0 0.0
        %531 = vmatprep.subr.mxu0 0.0
        %532 = vmatpush1.msra.mxu0 0.0
        %533 = vmatprep.subr.mxu0 0.0
        %534 = vmatpush1.msra.mxu0 0.0
        %535 = vmatprep.subr.mxu0 0.0
        %536 = vmatpush1.msra.mxu0 0.0
        %537 = vmatprep.subr.mxu0 0.0
        %538 = vmatpush1.msra.mxu0 0.0
        %539 = vmatprep.subr.mxu0 0.0
        %540 = vmatpush1.msra.mxu0 0.0
        %541 = vmatprep.subr.mxu0 0.0
        %542 = vmatpush1.msra.mxu0 0.0
        %543 = vmatprep.subr.mxu0 0.0
        %544 = vmatpush1.msra.mxu0 0.0
        %545 = vmatprep.subr.mxu0 0.0
        %546 = vmatpush1.msra.mxu0 0.0
        %547 = vmatprep.subr.mxu0 0.0
        %548 = vmatpush1.msra.mxu0 0.0
        %549 = vmatprep.subr.mxu0 0.0
        %550 = vmatpush1.msra.mxu0 0.0
        %551 = vmatprep.subr.mxu0 0.0
        %552 = vmatpush1.msra.mxu0 0.0
        %553 = vmatprep.mubr.f32.mxu0 0.0
        %554 = vmatmul.mubr.f32.gmra.mrb[0].mxu0 %v478
        %v555 = vpop.f32.mrb[0].mxu0
        %v556 = vadd.f32 %v459, %v555
        %v557 = vpop.f32.mrb[0].mxu0
        %v558 = vadd.f32 %v459, %v557
        %559 = vmatprep.mubr.f32.mxu0 0.0
        %560 = vmatmul.mubr.f32.gmra.mrb[0].mxu0 %v481
        %v561 = vpop.f32.mrb[0].mxu0
        %v562 = vadd.f32 %v464, %v561
        %v563 = vpop.f32.mrb[0].mxu0
        %v564 = vadd.f32 %v464, %v563
        %565 = vmatprep.mubr.f32.mxu0 0.0
        %566 = vmatmul.mubr.f32.gmra.mrb[0].mxu0 %v484
        %v567 = vpop.f32.mrb[0].mxu0
        %v568 = vadd.f32 %v469, %v567
        %v569 = vpop.f32.mrb[0].mxu0
        %v570 = vadd.f32 %v469, %v569
        %571 = vmatprep.mubr.f32.mxu0 0.0
        %572 = vmatmul.mubr.f32.gmra.mrb[0].mxu0 %v487
        %v573 = vpop.f32.mrb[0].mxu0
        %v574 = vadd.f32 %v474, %v573
        %v575 = vpop.f32.mrb[0].mxu0
        %v576 = vadd.f32 %v474, %v575
        %577 = vdwg.mxu0
        %578 = vmatprep.subr.mxu0 %v428
        %579 = vmatpush1.msra.mxu0 %v426
        %580 = vmatprep.subr.mxu0 %v434
        %581 = vmatpush1.msra.mxu0 %v432
        %582 = vmatprep.subr.mxu0 %v440
        %583 = vmatpush1.msra.mxu0 %v438
        %584 = vmatprep.subr.mxu0 %v446
        %585 = vmatpush1.msra.mxu0 %v444
        %586 = vmatprep.subr.mxu0 0.0
        %587 = vmatpush1.msra.mxu0 0.0
        %588 = vmatprep.subr.mxu0 0.0
        %589 = vmatpush1.msra.mxu0 0.0
        %590 = vmatprep.subr.mxu0 0.0
        %591 = vmatpush1.msra.mxu0 0.0
        %592 = vmatprep.subr.mxu0 0.0
        %593 = vmatpush1.msra.mxu0 0.0
        %594 = vmatprep.subr.mxu0 0.0
        %595 = vmatpush1.msra.mxu0 0.0
        %596 = vmatprep.subr.mxu0 0.0
        %597 = vmatpush1.msra.mxu0 0.0
        %598 = vmatprep.subr.mxu0 0.0
        %599 = vmatpush1.msra.mxu0 0.0
        %600 = vmatprep.subr.mxu0 0.0
        %601 = vmatpush1.msra.mxu0 0.0
        %602 = vmatprep.subr.mxu0 0.0
        %603 = vmatpush1.msra.mxu0 0.0
        %604 = vmatprep.subr.mxu0 0.0
        %605 = vmatpush1.msra.mxu0 0.0
        %606 = vmatprep.subr.mxu0 0.0
        %607 = vmatpush1.msra.mxu0 0.0
        %608 = vmatprep.subr.mxu0 0.0
        %609 = vmatpush1.msra.mxu0 0.0
        %610 = vmatprep.subr.mxu0 0.0
        %611 = vmatpush1.msra.mxu0 0.0
        %612 = vmatprep.subr.mxu0 0.0
        %613 = vmatpush1.msra.mxu0 0.0
        %614 = vmatprep.subr.mxu0 0.0
        %615 = vmatpush1.msra.mxu0 0.0
        %616 = vmatprep.subr.mxu0 0.0
        %617 = vmatpush1.msra.mxu0 0.0
        %618 = vmatprep.subr.mxu0 0.0
        %619 = vmatpush1.msra.mxu0 0.0
        %620 = vmatprep.subr.mxu0 0.0
        %621 = vmatpush1.msra.mxu0 0.0
        %622 = vmatprep.subr.mxu0 0.0
        %623 = vmatpush1.msra.mxu0 0.0
        %624 = vmatprep.subr.mxu0 0.0
        %625 = vmatpush1.msra.mxu0 0.0
        %626 = vmatprep.subr.mxu0 0.0
        %627 = vmatpush1.msra.mxu0 0.0
        %628 = vmatprep.subr.mxu0 0.0
        %629 = vmatpush1.msra.mxu0 0.0
        %630 = vmatprep.subr.mxu0 0.0
        %631 = vmatpush1.msra.mxu0 0.0
        %632 = vmatprep.subr.mxu0 0.0
        %633 = vmatpush1.msra.mxu0 0.0
        %634 = vmatprep.subr.mxu0 0.0
        %635 = vmatpush1.msra.mxu0 0.0
        %636 = vmatprep.subr.mxu0 0.0
        %637 = vmatpush1.msra.mxu0 0.0
        %638 = vmatprep.subr.mxu0 0.0
        %639 = vmatpush1.msra.mxu0 0.0
        %640 = vmatprep.subr.mxu0 0.0
        %641 = vmatpush1.msra.mxu0 0.0
        %642 = vmatprep.mubr.f32.mxu0 0.0
        %643 = vmatmul.mubr.f32.gmra.mrb[0].mxu0 %v478
        %v644 = vpop.f32.mrb[0].mxu0
        %v645 = vadd.f32 %v459, %v644
        %v646 = vpop.f32.mrb[0].mxu0
        %v647 = vadd.f32 %v459, %v646
        %648 = vmatprep.mubr.f32.mxu0 0.0
        %649 = vmatmul.mubr.f32.gmra.mrb[0].mxu0 %v481
        %v650 = vpop.f32.mrb[0].mxu0
        %v651 = vadd.f32 %v464, %v650
        %v652 = vpop.f32.mrb[0].mxu0
        %v653 = vadd.f32 %v464, %v652
        %654 = vmatprep.mubr.f32.mxu0 0.0
        %655 = vmatmul.mubr.f32.gmra.mrb[0].mxu0 %v484
        %v656 = vpop.f32.mrb[0].mxu0
        %v657 = vadd.f32 %v469, %v656
        %v658 = vpop.f32.mrb[0].mxu0
        %v659 = vadd.f32 %v469, %v658
        %660 = vmatprep.mubr.f32.mxu0 0.0
        %661 = vmatmul.mubr.f32.gmra.mrb[0].mxu0 %v487
        %v662 = vpop.f32.mrb[0].mxu0
        %v663 = vadd.f32 %v474, %v662
        %v664 = vpop.f32.mrb[0].mxu0
        %v665 = vadd.f32 %v474, %v664
        %666 = vdwg.mxu0
        %v667 = vmax.f32 %v556, 0.0
        %v668 = vmax.f32 %v558, 0.0
        %v669 = vmax.f32 %v645, 0.0
        %v670 = vmax.f32 %v647, 0.0
        %v671 = vmax.f32 %v562, 0.0
        %v672 = vmax.f32 %v564, 0.0
        %v673 = vmax.f32 %v651, 0.0
        %v674 = vmax.f32 %v653, 0.0
        %v675 = vmax.f32 %v568, 0.0
        %v676 = vmax.f32 %v570, 0.0
        %v677 = vmax.f32 %v657, 0.0
        %v678 = vmax.f32 %v659, 0.0
        %v679 = vmax.f32 %v574, 0.0
        %v680 = vmax.f32 %v576, 0.0
        %v681 = vmax.f32 %v663, 0.0
        %v682 = vmax.f32 %v665, 0.0
        %v683 = vld [vmem:[%s1 + $0x40] sm:$0xff]
        %v684 = vld [vmem:[%s1 + $0x48] sm:$0xff]
        %v685 = vld [vmem:[%s1 + $0x50] sm:$0xff]
        %v686 = vld [vmem:[%s1 + $0x58] sm:$0xff]
        %v687 = vld [vmem:[%s2 + $0x40] sm:$0xff]
        %v688 = vld [vmem:[%s2 + $0x48] sm:$0xff]
        %v689 = vld [vmem:[%s2 + $0x50] sm:$0xff]
        %v690 = vld [vmem:[%s2 + $0x58] sm:$0xff]
        %692 = vset.pattern.permute.xlu0 0
        %693 = vperm.xlu0 %692, %v687
        %v694 = vpop.permute.xlu0 %693
        %697 = vset.pattern.permute.xlu0 0
        %698 = vperm.xlu0 %697, %v688
        %v699 = vpop.permute.xlu0 %698
        %702 = vset.pattern.permute.xlu0 0
        %703 = vperm.xlu0 %702, %v689
        %v704 = vpop.permute.xlu0 %703
        %707 = vset.pattern.permute.xlu0 0
        %708 = vperm.xlu0 %707, %v690
        %v709 = vpop.permute.xlu0 %708
        %v712 = vsel %vm476, %v683, 0
        %v715 = vsel %vm476, %v684, 0
        %v718 = vsel %vm476, %v685, 0
        %v721 = vsel %vm476, %v686, 0
        %723 = vmatprep.subr.mxu0 %v668
        %724 = vmatpush1.msra.mxu0 %v667
        %725 = vmatprep.subr.mxu0 %v672
        %726 = vmatpush1.msra.mxu0 %v671
        %727 = vmatprep.subr.mxu0 %v676
        %728 = vmatpush1.msra.mxu0 %v675
        %729 = vmatprep.subr.mxu0 %v680
        %730 = vmatpush1.msra.mxu0 %v679
        %731 = vmatprep.subr.mxu0 0.0
        %732 = vmatpush1.msra.mxu0 0.0
        %733 = vmatprep.subr.mxu0 0.0
        %734 = vmatpush1.msra.mxu0 0.0
        %735 = vmatprep.subr.mxu0 0.0
        %736 = vmatpush1.msra.mxu0 0.0
        %737 = vmatprep.subr.mxu0 0.0
        %738 = vmatpush1.msra.mxu0 0.0
        %739 = vmatprep.subr.mxu0 0.0
        %740 = vmatpush1.msra.mxu0 0.0
        %741 = vmatprep.subr.mxu0 0.0
        %742 = vmatpush1.msra.mxu0 0.0
        %743 = vmatprep.subr.mxu0 0.0
        %744 = vmatpush1.msra.mxu0 0.0
        %745 = vmatprep.subr.mxu0 0.0
        %746 = vmatpush1.msra.mxu0 0.0
        %747 = vmatprep.subr.mxu0 0.0
        %748 = vmatpush1.msra.mxu0 0.0
        %749 = vmatprep.subr.mxu0 0.0
        %750 = vmatpush1.msra.mxu0 0.0
        %751 = vmatprep.subr.mxu0 0.0
        %752 = vmatpush1.msra.mxu0 0.0
        %753 = vmatprep.subr.mxu0 0.0
        %754 = vmatpush1.msra.mxu0 0.0
        %755 = vmatprep.subr.mxu0 0.0
        %756 = vmatpush1.msra.mxu0 0.0
        %757 = vmatprep.subr.mxu0 0.0
        %758 = vmatpush1.msra.mxu0 0.0
        %759 = vmatprep.subr.mxu0 0.0
        %760 = vmatpush1.msra.mxu0 0.0
        %761 = vmatprep.subr.mxu0 0.0
        %762 = vmatpush1.msra.mxu0 0.0
        %763 = vmatprep.subr.mxu0 0.0
        %764 = vmatpush1.msra.mxu0 0.0
        %765 = vmatprep.subr.mxu0 0.0
        %766 = vmatpush1.msra.mxu0 0.0
        %767 = vmatprep.subr.mxu0 0.0
        %768 = vmatpush1.msra.mxu0 0.0
        %769 = vmatprep.subr.mxu0 0.0
        %770 = vmatpush1.msra.mxu0 0.0
        %771 = vmatprep.subr.mxu0 0.0
        %772 = vmatpush1.msra.mxu0 0.0
        %773 = vmatprep.subr.mxu0 0.0
        %774 = vmatpush1.msra.mxu0 0.0
        %775 = vmatprep.subr.mxu0 0.0
        %776 = vmatpush1.msra.mxu0 0.0
        %777 = vmatprep.subr.mxu0 0.0
        %778 = vmatpush1.msra.mxu0 0.0
        %779 = vmatprep.subr.mxu0 0.0
        %780 = vmatpush1.msra.mxu0 0.0
        %781 = vmatprep.subr.mxu0 0.0
        %782 = vmatpush1.msra.mxu0 0.0
        %783 = vmatprep.subr.mxu0 0.0
        %784 = vmatpush1.msra.mxu0 0.0
        %785 = vmatprep.subr.mxu0 0.0
        %786 = vmatpush1.msra.mxu0 0.0
        %787 = vmatprep.mubr.f32.mxu0 0.0
        %788 = vmatmul.mubr.f32.gmra.mrb[0].mxu0 %v712
        %v789 = vpop.f32.mrb[0].mxu0
        %v790 = vadd.f32 %v694, %v789
        %v791 = vpop.f32.mrb[0].mxu0
        %v792 = vadd.f32 %v694, %v791
        %793 = vmatprep.mubr.f32.mxu0 0.0
        %794 = vmatmul.mubr.f32.gmra.mrb[0].mxu0 %v715
        %v795 = vpop.f32.mrb[0].mxu0
        %v796 = vadd.f32 %v699, %v795
        %v797 = vpop.f32.mrb[0].mxu0
        %v798 = vadd.f32 %v699, %v797
        %799 = vmatprep.mubr.f32.mxu0 0.0
        %800 = vmatmul.mubr.f32.gmra.mrb[0].mxu0 %v718
        %v801 = vpop.f32.mrb[0].mxu0
        %v802 = vadd.f32 %v704, %v801
        %v803 = vpop.f32.mrb[0].mxu0
        %v804 = vadd.f32 %v704, %v803
        %805 = vmatprep.mubr.f32.mxu0 0.0
        %806 = vmatmul.mubr.f32.gmra.mrb[0].mxu0 %v721
        %v807 = vpop.f32.mrb[0].mxu0
        %v808 = vadd.f32 %v709, %v807
        %v809 = vpop.f32.mrb[0].mxu0
        %v810 = vadd.f32 %v709, %v809
        %811 = vdwg.mxu0
        %812 = vmatprep.subr.mxu0 %v670
        %813 = vmatpush1.msra.mxu0 %v669
        %814 = vmatprep.subr.mxu0 %v674
        %815 = vmatpush1.msra.mxu0 %v673
        %816 = vmatprep.subr.mxu0 %v678
        %817 = vmatpush1.msra.mxu0 %v677
        %818 = vmatprep.subr.mxu0 %v682
        %819 = vmatpush1.msra.mxu0 %v681
        %820 = vmatprep.subr.mxu0 0.0
        %821 = vmatpush1.msra.mxu0 0.0
        %822 = vmatprep.subr.mxu0 0.0
        %823 = vmatpush1.msra.mxu0 0.0
        %824 = vmatprep.subr.mxu0 0.0
        %825 = vmatpush1.msra.mxu0 0.0
        %826 = vmatprep.subr.mxu0 0.0
        %827 = vmatpush1.msra.mxu0 0.0
        %828 = vmatprep.subr.mxu0 0.0
        %829 = vmatpush1.msra.mxu0 0.0
        %830 = vmatprep.subr.mxu0 0.0
        %831 = vmatpush1.msra.mxu0 0.0
        %832 = vmatprep.subr.mxu0 0.0
        %833 = vmatpush1.msra.mxu0 0.0
        %834 = vmatprep.subr.mxu0 0.0
        %835 = vmatpush1.msra.mxu0 0.0
        %836 = vmatprep.subr.mxu0 0.0
        %837 = vmatpush1.msra.mxu0 0.0
        %838 = vmatprep.subr.mxu0 0.0
        %839 = vmatpush1.msra.mxu0 0.0
        %840 = vmatprep.subr.mxu0 0.0
        %841 = vmatpush1.msra.mxu0 0.0
        %842 = vmatprep.subr.mxu0 0.0
        %843 = vmatpush1.msra.mxu0 0.0
        %844 = vmatprep.subr.mxu0 0.0
        %845 = vmatpush1.msra.mxu0 0.0
        %846 = vmatprep.subr.mxu0 0.0
        %847 = vmatpush1.msra.mxu0 0.0
        %848 = vmatprep.subr.mxu0 0.0
        %849 = vmatpush1.msra.mxu0 0.0
        %850 = vmatprep.subr.mxu0 0.0
        %851 = vmatpush1.msra.mxu0 0.0
        %852 = vmatprep.subr.mxu0 0.0
        %853 = vmatpush1.msra.mxu0 0.0
        %854 = vmatprep.subr.mxu0 0.0
        %855 = vmatpush1.msra.mxu0 0.0
        %856 = vmatprep.subr.mxu0 0.0
        %857 = vmatpush1.msra.mxu0 0.0
        %858 = vmatprep.subr.mxu0 0.0
        %859 = vmatpush1.msra.mxu0 0.0
        %860 = vmatprep.subr.mxu0 0.0
        %861 = vmatpush1.msra.mxu0 0.0
        %862 = vmatprep.subr.mxu0 0.0
        %863 = vmatpush1.msra.mxu0 0.0
        %864 = vmatprep.subr.mxu0 0.0
        %865 = vmatpush1.msra.mxu0 0.0
        %866 = vmatprep.subr.mxu0 0.0
        %867 = vmatpush1.msra.mxu0 0.0
        %868 = vmatprep.subr.mxu0 0.0
        %869 = vmatpush1.msra.mxu0 0.0
        %870 = vmatprep.subr.mxu0 0.0
        %871 = vmatpush1.msra.mxu0 0.0
        %872 = vmatprep.subr.mxu0 0.0
        %873 = vmatpush1.msra.mxu0 0.0
        %874 = vmatprep.subr.mxu0 0.0
        %875 = vmatpush1.msra.mxu0 0.0
        %876 = vmatprep.mubr.f32.mxu0 0.0
        %877 = vmatmul.mubr.f32.gmra.mrb[0].mxu0 %v712
        %v878 = vpop.f32.mrb[0].mxu0
        %v879 = vadd.f32 %v694, %v878
        %v880 = vpop.f32.mrb[0].mxu0
        %v881 = vadd.f32 %v694, %v880
        %882 = vmatprep.mubr.f32.mxu0 0.0
        %883 = vmatmul.mubr.f32.gmra.mrb[0].mxu0 %v715
        %v884 = vpop.f32.mrb[0].mxu0
        %v885 = vadd.f32 %v699, %v884
        %v886 = vpop.f32.mrb[0].mxu0
        %v887 = vadd.f32 %v699, %v886
        %888 = vmatprep.mubr.f32.mxu0 0.0
        %889 = vmatmul.mubr.f32.gmra.mrb[0].mxu0 %v718
        %v890 = vpop.f32.mrb[0].mxu0
        %v891 = vadd.f32 %v704, %v890
        %v892 = vpop.f32.mrb[0].mxu0
        %v893 = vadd.f32 %v704, %v892
        %894 = vmatprep.mubr.f32.mxu0 0.0
        %895 = vmatmul.mubr.f32.gmra.mrb[0].mxu0 %v721
        %v896 = vpop.f32.mrb[0].mxu0
        %v897 = vadd.f32 %v709, %v896
        %v898 = vpop.f32.mrb[0].mxu0
        %v899 = vadd.f32 %v709, %v898
        %900 = vdwg.mxu0
        %v901 = vmax.f32 %v790, 0.0
        %v902 = vmax.f32 %v792, 0.0
        %v903 = vmax.f32 %v879, 0.0
        %v904 = vmax.f32 %v881, 0.0
        %v905 = vmax.f32 %v796, 0.0
        %v906 = vmax.f32 %v798, 0.0
        %v907 = vmax.f32 %v885, 0.0
        %v908 = vmax.f32 %v887, 0.0
        %v909 = vmax.f32 %v802, 0.0
        %v910 = vmax.f32 %v804, 0.0
        %v911 = vmax.f32 %v891, 0.0
        %v912 = vmax.f32 %v893, 0.0
        %v913 = vmax.f32 %v808, 0.0
        %v914 = vmax.f32 %v810, 0.0
        %v915 = vmax.f32 %v897, 0.0
        %v916 = vmax.f32 %v899, 0.0
        %v917 = vld [vmem:[%s1 + $0x60] sm:$0xff]
        %v918 = vld [vmem:[%s1 + $0x68] sm:$0xff]
        %v919 = vld [vmem:[%s1 + $0x70] sm:$0xff]
        %v920 = vld [vmem:[%s1 + $0x78] sm:$0xff]
        %v921 = vld [vmem:[%s2 + $0x60] sm:$0x1]
        %923 = vset.pattern.permute.xlu0 0
        %924 = vperm.xlu0 %923, %v917
        %v925 = vpop.permute.xlu0 %924
        %928 = vset.pattern.permute.xlu0 0
        %929 = vperm.xlu0 %928, %v918
        %v930 = vpop.permute.xlu0 %929
        %933 = vset.pattern.permute.xlu0 0
        %934 = vperm.xlu0 %933, %v919
        %v935 = vpop.permute.xlu0 %934
        %938 = vset.pattern.permute.xlu0 0
        %939 = vperm.xlu0 %938, %v920
        %v940 = vpop.permute.xlu0 %939
        %v942 = vmul.f32 %v901, %v925
        %v943 = vmul.f32 %v902, %v925
        %v944 = vmul.f32 %v903, %v925
        %v945 = vmul.f32 %v904, %v925
        %v946 = vmul.f32 %v905, %v930
        %v947 = vmul.f32 %v906, %v930
        %v948 = vmul.f32 %v907, %v930
        %v949 = vmul.f32 %v908, %v930
        %v950 = vmul.f32 %v909, %v935
        %v951 = vmul.f32 %v910, %v935
        %v952 = vmul.f32 %v911, %v935
        %v953 = vmul.f32 %v912, %v935
        %v954 = vmul.f32 %v913, %v940
        %v955 = vmul.f32 %v914, %v940
        %v956 = vmul.f32 %v915, %v940
        %v957 = vmul.f32 %v916, %v940
        %v958 = vadd.f32 %v942, %v946
        %v959 = vadd.f32 %v958, %v950
        %v960 = vadd.f32 %v959, %v954
        %v961 = vrot.slane %v960, 4
        %v962 = vadd.f32 %v960, %v961
        %v963 = vrot.slane %v962, 2
        %v964 = vadd.f32 %v962, %v963
        %v965 = vrot.slane %v964, 1
        %v966 = vadd.f32 %v964, %v965
        %v967 = vadd.f32 %v943, %v947
        %v968 = vadd.f32 %v967, %v951
        %v969 = vadd.f32 %v968, %v955
        %v970 = vrot.slane %v969, 4
        %v971 = vadd.f32 %v969, %v970
        %v972 = vrot.slane %v971, 2
        %v973 = vadd.f32 %v971, %v972
        %v974 = vrot.slane %v973, 1
        %v975 = vadd.f32 %v973, %v974
        %v976 = vadd.f32 %v944, %v948
        %v977 = vadd.f32 %v976, %v952
        %v978 = vadd.f32 %v977, %v956
        %v979 = vrot.slane %v978, 4
        %v980 = vadd.f32 %v978, %v979
        %v981 = vrot.slane %v980, 2
        %v982 = vadd.f32 %v980, %v981
        %v983 = vrot.slane %v982, 1
        %v984 = vadd.f32 %v982, %v983
        %v985 = vadd.f32 %v945, %v949
        %v986 = vadd.f32 %v985, %v953
        %v987 = vadd.f32 %v986, %v957
        %v988 = vrot.slane %v987, 4
        %v989 = vadd.f32 %v987, %v988
        %v990 = vrot.slane %v989, 2
        %v991 = vadd.f32 %v989, %v990
        %v992 = vrot.slane %v991, 1
        %v993 = vadd.f32 %v991, %v992
        %995 = vset.pattern.permute.xlu0 0
        %996 = vperm.xlu0 %995, %v921
        %v997 = vpop.permute.xlu0 %996
        %v999 = vadd.f32 %v966, %v997
        %v1000 = vadd.f32 %v975, %v997
        %v1001 = vadd.f32 %v984, %v997
        %v1002 = vadd.f32 %v993, %v997
        %v1007 = vcombine.low %v999, %v1000
        %v1008 = vcombine.low %v1001, %v1002
        %v1010 = vunpack.c.l.s4 1966171168
        %v1011 = vunpack.c.0.s8 %v1010
        %v1012 = vlaneseq
        %v1013 = vshrl.u32 %v1012, 7
        %v1014 = vsub.s32 %v1011, %v1013
        %v1015 = vrot.slane %v1007, %v1014
        %v1017 = vunpack.c.l.s4 1966171168
        %v1018 = vunpack.c.0.s8 %v1017
        %v1019 = vlaneseq
        %v1020 = vshrl.u32 %v1019, 7
        %v1021 = vsub.s32 %v1018, %v1020
        %v1022 = vrot.slane %v1008, %v1021
        %v1023 = vcombine.low %v1015, %v1022
        %v1025 = vunpack.c.l.s4 1966171168
        %v1026 = vunpack.c.0.s8 %v1025
        %v1027 = vlaneseq
        %v1028 = vshrl.u32 %v1027, 7
        %v1029 = vsub.s32 %v1026, %v1028
        %v1030 = vrot.slane %v1023, %v1029
        %v1032 = vlaneseq
        %vm1033 = vcmp.ge.s32.totalorder %v1032, 0
        %vm1034 = vcmp.lt.s32.totalorder %v1032, 512
        %vm1035 = vmand %vm1033, %vm1034
        %1036 = vst.msk [vmem:[%s218] sm:$0xf] %vm1035, %v1030
        %s1037 = scalar_lea.vmem %s198, 32 [#allocation2]
        %v1038 = vld [vmem:[%s1037] sm:$0xff]
        %v1039 = vld [vmem:[%s1037 + $0x8] sm:$0xff]
        %v1040 = vld [vmem:[%s1037 + $0x10] sm:$0xff]
        %v1041 = vld [vmem:[%s1037 + $0x18] sm:$0xff]
        %v1042 = vld [vmem:[%s1037 + $0x40] sm:$0xff]
        %v1043 = vld [vmem:[%s1037 + $0x48] sm:$0xff]
        %v1044 = vld [vmem:[%s1037 + $0x50] sm:$0xff]
        %v1045 = vld [vmem:[%s1037 + $0x58] sm:$0xff]
        %v1046 = vld [vmem:[%s1] sm:$0xff]
        %v1047 = vld [vmem:[%s1 + $0x8] sm:$0xff]
        %v1048 = vld [vmem:[%s1 + $0x10] sm:$0xff]
        %v1049 = vld [vmem:[%s1 + $0x18] sm:$0xff]
        %v1050 = vld [vmem:[%s2] sm:$0xff]
        %v1051 = vld [vmem:[%s2 + $0x8] sm:$0xff]
        %v1052 = vld [vmem:[%s2 + $0x10] sm:$0xff]
        %v1053 = vld [vmem:[%s2 + $0x18] sm:$0xff]
        %1055 = vset.pattern.permute.xlu0 0
        %1056 = vperm.xlu0 %1055, %v1050
        %v1057 = vpop.permute.xlu0 %1056
        %1060 = vset.pattern.permute.xlu0 0
        %1061 = vperm.xlu0 %1060, %v1051
        %v1062 = vpop.permute.xlu0 %1061
        %1065 = vset.pattern.permute.xlu0 0
        %1066 = vperm.xlu0 %1065, %v1052
        %v1067 = vpop.permute.xlu0 %1066
        %1070 = vset.pattern.permute.xlu0 0
        %1071 = vperm.xlu0 %1070, %v1053
        %v1072 = vpop.permute.xlu0 %1071
        %v1075 = vsel %vm257, %v1046, 0
        %v1078 = vsel %vm257, %v1047, 0
        %v1081 = vsel %vm257, %v1048, 0
        %v1084 = vsel %vm257, %v1049, 0
        %1086 = vmatprep.subr.mxu0 %v1039
        %1087 = vmatpush1.msra.mxu0 %v1038
        %1088 = vmatprep.subr.mxu0 %v1043
        %1089 = vmatpush1.msra.mxu0 %v1042
        %1090 = vmatprep.subr.mxu0 0.0
        %1091 = vmatpush1.msra.mxu0 0.0
        %1092 = vmatprep.subr.mxu0 0.0
        %1093 = vmatpush1.msra.mxu0 0.0
        %1094 = vmatprep.subr.mxu0 0.0
        %1095 = vmatpush1.msra.mxu0 0.0
        %1096 = vmatprep.subr.mxu0 0.0
        %1097 = vmatpush1.msra.mxu0 0.0
        %1098 = vmatprep.subr.mxu0 0.0
        %1099 = vmatpush1.msra.mxu0 0.0
        %1100 = vmatprep.subr.mxu0 0.0
        %1101 = vmatpush1.msra.mxu0 0.0
        %1102 = vmatprep.subr.mxu0 0.0
        %1103 = vmatpush1.msra.mxu0 0.0
        %1104 = vmatprep.subr.mxu0 0.0
        %1105 = vmatpush1.msra.mxu0 0.0
        %1106 = vmatprep.subr.mxu0 0.0
        %1107 = vmatpush1.msra.mxu0 0.0
        %1108 = vmatprep.subr.mxu0 0.0
        %1109 = vmatpush1.msra.mxu0 0.0
        %1110 = vmatprep.subr.mxu0 0.0
        %1111 = vmatpush1.msra.mxu0 0.0
        %1112 = vmatprep.subr.mxu0 0.0
        %1113 = vmatpush1.msra.mxu0 0.0
        %1114 = vmatprep.subr.mxu0 0.0
        %1115 = vmatpush1.msra.mxu0 0.0
        %1116 = vmatprep.subr.mxu0 0.0
        %1117 = vmatpush1.msra.mxu0 0.0
        %1118 = vmatprep.subr.mxu0 0.0
        %1119 = vmatpush1.msra.mxu0 0.0
        %1120 = vmatprep.subr.mxu0 0.0
        %1121 = vmatpush1.msra.mxu0 0.0
        %1122 = vmatprep.subr.mxu0 0.0
        %1123 = vmatpush1.msra.mxu0 0.0
        %1124 = vmatprep.subr.mxu0 0.0
        %1125 = vmatpush1.msra.mxu0 0.0
        %1126 = vmatprep.subr.mxu0 0.0
        %1127 = vmatpush1.msra.mxu0 0.0
        %1128 = vmatprep.subr.mxu0 0.0
        %1129 = vmatpush1.msra.mxu0 0.0
        %1130 = vmatprep.subr.mxu0 0.0
        %1131 = vmatpush1.msra.mxu0 0.0
        %1132 = vmatprep.subr.mxu0 0.0
        %1133 = vmatpush1.msra.mxu0 0.0
        %1134 = vmatprep.subr.mxu0 0.0
        %1135 = vmatpush1.msra.mxu0 0.0
        %1136 = vmatprep.subr.mxu0 0.0
        %1137 = vmatpush1.msra.mxu0 0.0
        %1138 = vmatprep.subr.mxu0 0.0
        %1139 = vmatpush1.msra.mxu0 0.0
        %1140 = vmatprep.subr.mxu0 0.0
        %1141 = vmatpush1.msra.mxu0 0.0
        %1142 = vmatprep.subr.mxu0 0.0
        %1143 = vmatpush1.msra.mxu0 0.0
        %1144 = vmatprep.subr.mxu0 0.0
        %1145 = vmatpush1.msra.mxu0 0.0
        %1146 = vmatprep.subr.mxu0 0.0
        %1147 = vmatpush1.msra.mxu0 0.0
        %1148 = vmatprep.subr.mxu0 0.0
        %1149 = vmatpush1.msra.mxu0 0.0
        %1150 = vmatprep.mubr.f32.mxu0 0.0
        %1151 = vmatmul.mubr.f32.gmra.mrb[0].mxu0 %v1075
        %v1152 = vpop.f32.mrb[0].mxu0
        %v1153 = vadd.f32 %v1057, %v1152
        %v1154 = vpop.f32.mrb[0].mxu0
        %v1155 = vadd.f32 %v1057, %v1154
        %1156 = vmatprep.mubr.f32.mxu0 0.0
        %1157 = vmatmul.mubr.f32.gmra.mrb[0].mxu0 %v1078
        %v1158 = vpop.f32.mrb[0].mxu0
        %v1159 = vadd.f32 %v1062, %v1158
        %v1160 = vpop.f32.mrb[0].mxu0
        %v1161 = vadd.f32 %v1062, %v1160
        %1162 = vmatprep.mubr.f32.mxu0 0.0
        %1163 = vmatmul.mubr.f32.gmra.mrb[0].mxu0 %v1081
        %v1164 = vpop.f32.mrb[0].mxu0
        %v1165 = vadd.f32 %v1067, %v1164
        %v1166 = vpop.f32.mrb[0].mxu0
        %v1167 = vadd.f32 %v1067, %v1166
        %1168 = vmatprep.mubr.f32.mxu0 0.0
        %1169 = vmatmul.mubr.f32.gmra.mrb[0].mxu0 %v1084
        %v1170 = vpop.f32.mrb[0].mxu0
        %v1171 = vadd.f32 %v1072, %v1170
        %v1172 = vpop.f32.mrb[0].mxu0
        %v1173 = vadd.f32 %v1072, %v1172
        %1174 = vdwg.mxu0
        %1175 = vmatprep.subr.mxu0 %v1041
        %1176 = vmatpush1.msra.mxu0 %v1040
        %1177 = vmatprep.subr.mxu0 %v1045
        %1178 = vmatpush1.msra.mxu0 %v1044
        %1179 = vmatprep.subr.mxu0 0.0
        %1180 = vmatpush1.msra.mxu0 0.0
        %1181 = vmatprep.subr.mxu0 0.0
        %1182 = vmatpush1.msra.mxu0 0.0
        %1183 = vmatprep.subr.mxu0 0.0
        %1184 = vmatpush1.msra.mxu0 0.0
        %1185 = vmatprep.subr.mxu0 0.0
        %1186 = vmatpush1.msra.mxu0 0.0
        %1187 = vmatprep.subr.mxu0 0.0
        %1188 = vmatpush1.msra.mxu0 0.0
        %1189 = vmatprep.subr.mxu0 0.0
        %1190 = vmatpush1.msra.mxu0 0.0
        %1191 = vmatprep.subr.mxu0 0.0
        %1192 = vmatpush1.msra.mxu0 0.0
        %1193 = vmatprep.subr.mxu0 0.0
        %1194 = vmatpush1.msra.mxu0 0.0
        %1195 = vmatprep.subr.mxu0 0.0
        %1196 = vmatpush1.msra.mxu0 0.0
        %1197 = vmatprep.subr.mxu0 0.0
        %1198 = vmatpush1.msra.mxu0 0.0
        %1199 = vmatprep.subr.mxu0 0.0
        %1200 = vmatpush1.msra.mxu0 0.0
        %1201 = vmatprep.subr.mxu0 0.0
        %1202 = vmatpush1.msra.mxu0 0.0
        %1203 = vmatprep.subr.mxu0 0.0
        %1204 = vmatpush1.msra.mxu0 0.0
        %1205 = vmatprep.subr.mxu0 0.0
        %1206 = vmatpush1.msra.mxu0 0.0
        %1207 = vmatprep.subr.mxu0 0.0
        %1208 = vmatpush1.msra.mxu0 0.0
        %1209 = vmatprep.subr.mxu0 0.0
        %1210 = vmatpush1.msra.mxu0 0.0
        %1211 = vmatprep.subr.mxu0 0.0
        %1212 = vmatpush1.msra.mxu0 0.0
        %1213 = vmatprep.subr.mxu0 0.0
        %1214 = vmatpush1.msra.mxu0 0.0
        %1215 = vmatprep.subr.mxu0 0.0
        %1216 = vmatpush1.msra.mxu0 0.0
        %1217 = vmatprep.subr.mxu0 0.0
        %1218 = vmatpush1.msra.mxu0 0.0
        %1219 = vmatprep.subr.mxu0 0.0
        %1220 = vmatpush1.msra.mxu0 0.0
        %1221 = vmatprep.subr.mxu0 0.0
        %1222 = vmatpush1.msra.mxu0 0.0
        %1223 = vmatprep.subr.mxu0 0.0
        %1224 = vmatpush1.msra.mxu0 0.0
        %1225 = vmatprep.subr.mxu0 0.0
        %1226 = vmatpush1.msra.mxu0 0.0
        %1227 = vmatprep.subr.mxu0 0.0
        %1228 = vmatpush1.msra.mxu0 0.0
        %1229 = vmatprep.subr.mxu0 0.0
        %1230 = vmatpush1.msra.mxu0 0.0
        %1231 = vmatprep.subr.mxu0 0.0
        %1232 = vmatpush1.msra.mxu0 0.0
        %1233 = vmatprep.subr.mxu0 0.0
        %1234 = vmatpush1.msra.mxu0 0.0
        %1235 = vmatprep.subr.mxu0 0.0
        %1236 = vmatpush1.msra.mxu0 0.0
        %1237 = vmatprep.subr.mxu0 0.0
        %1238 = vmatpush1.msra.mxu0 0.0
        %1239 = vmatprep.mubr.f32.mxu0 0.0
        %1240 = vmatmul.mubr.f32.gmra.mrb[0].mxu0 %v1075
        %v1241 = vpop.f32.mrb[0].mxu0
        %v1242 = vadd.f32 %v1057, %v1241
        %v1243 = vpop.f32.mrb[0].mxu0
        %v1244 = vadd.f32 %v1057, %v1243
        %1245 = vmatprep.mubr.f32.mxu0 0.0
        %1246 = vmatmul.mubr.f32.gmra.mrb[0].mxu0 %v1078
        %v1247 = vpop.f32.mrb[0].mxu0
        %v1248 = vadd.f32 %v1062, %v1247
        %v1249 = vpop.f32.mrb[0].mxu0
        %v1250 = vadd.f32 %v1062, %v1249
        %1251 = vmatprep.mubr.f32.mxu0 0.0
        %1252 = vmatmul.mubr.f32.gmra.mrb[0].mxu0 %v1081
        %v1253 = vpop.f32.mrb[0].mxu0
        %v1254 = vadd.f32 %v1067, %v1253
        %v1255 = vpop.f32.mrb[0].mxu0
        %v1256 = vadd.f32 %v1067, %v1255
        %1257 = vmatprep.mubr.f32.mxu0 0.0
        %1258 = vmatmul.mubr.f32.gmra.mrb[0].mxu0 %v1084
        %v1259 = vpop.f32.mrb[0].mxu0
        %v1260 = vadd.f32 %v1072, %v1259
        %v1261 = vpop.f32.mrb[0].mxu0
        %v1262 = vadd.f32 %v1072, %v1261
        %1263 = vdwg.mxu0
        %v1264 = vld [vmem:[%s1 + $0x20] sm:$0xff]
        %v1265 = vld [vmem:[%s1 + $0x28] sm:$0xff]
        %v1266 = vld [vmem:[%s1 + $0x30] sm:$0xff]
        %v1267 = vld [vmem:[%s1 + $0x38] sm:$0xff]
        %v1268 = vld [vmem:[%s2 + $0x20] sm:$0xff]
        %v1269 = vld [vmem:[%s2 + $0x28] sm:$0xff]
        %v1270 = vld [vmem:[%s2 + $0x30] sm:$0xff]
        %v1271 = vld [vmem:[%s2 + $0x38] sm:$0xff]
        %1273 = vset.pattern.permute.xlu0 0
        %1274 = vperm.xlu0 %1273, %v1268
        %v1275 = vpop.permute.xlu0 %1274
        %1278 = vset.pattern.permute.xlu0 0
        %1279 = vperm.xlu0 %1278, %v1269
        %v1280 = vpop.permute.xlu0 %1279
        %1283 = vset.pattern.permute.xlu0 0
        %1284 = vperm.xlu0 %1283, %v1270
        %v1285 = vpop.permute.xlu0 %1284
        %1288 = vset.pattern.permute.xlu0 0
        %1289 = vperm.xlu0 %1288, %v1271
        %v1290 = vpop.permute.xlu0 %1289
        %v1293 = vsel %vm476, %v1264, 0
        %v1296 = vsel %vm476, %v1265, 0
        %v1299 = vsel %vm476, %v1266, 0
        %v1302 = vsel %vm476, %v1267, 0
        %1304 = vmatprep.subr.mxu0 %v1155
        %1305 = vmatpush1.msra.mxu0 %v1153
        %1306 = vmatprep.subr.mxu0 %v1161
        %1307 = vmatpush1.msra.mxu0 %v1159
        %1308 = vmatprep.subr.mxu0 %v1167
        %1309 = vmatpush1.msra.mxu0 %v1165
        %1310 = vmatprep.subr.mxu0 %v1173
        %1311 = vmatpush1.msra.mxu0 %v1171
        %1312 = vmatprep.subr.mxu0 0.0
        %1313 = vmatpush1.msra.mxu0 0.0
        %1314 = vmatprep.subr.mxu0 0.0
        %1315 = vmatpush1.msra.mxu0 0.0
        %1316 = vmatprep.subr.mxu0 0.0
        %1317 = vmatpush1.msra.mxu0 0.0
        %1318 = vmatprep.subr.mxu0 0.0
        %1319 = vmatpush1.msra.mxu0 0.0
        %1320 = vmatprep.subr.mxu0 0.0
        %1321 = vmatpush1.msra.mxu0 0.0
        %1322 = vmatprep.subr.mxu0 0.0
        %1323 = vmatpush1.msra.mxu0 0.0
        %1324 = vmatprep.subr.mxu0 0.0
        %1325 = vmatpush1.msra.mxu0 0.0
        %1326 = vmatprep.subr.mxu0 0.0
        %1327 = vmatpush1.msra.mxu0 0.0
        %1328 = vmatprep.subr.mxu0 0.0
        %1329 = vmatpush1.msra.mxu0 0.0
        %1330 = vmatprep.subr.mxu0 0.0
        %1331 = vmatpush1.msra.mxu0 0.0
        %1332 = vmatprep.subr.mxu0 0.0
        %1333 = vmatpush1.msra.mxu0 0.0
        %1334 = vmatprep.subr.mxu0 0.0
        %1335 = vmatpush1.msra.mxu0 0.0
        %1336 = vmatprep.subr.mxu0 0.0
        %1337 = vmatpush1.msra.mxu0 0.0
        %1338 = vmatprep.subr.mxu0 0.0
        %1339 = vmatpush1.msra.mxu0 0.0
        %1340 = vmatprep.subr.mxu0 0.0
        %1341 = vmatpush1.msra.mxu0 0.0
        %1342 = vmatprep.subr.mxu0 0.0
        %1343 = vmatpush1.msra.mxu0 0.0
        %1344 = vmatprep.subr.mxu0 0.0
        %1345 = vmatpush1.msra.mxu0 0.0
        %1346 = vmatprep.subr.mxu0 0.0
        %1347 = vmatpush1.msra.mxu0 0.0
        %1348 = vmatprep.subr.mxu0 0.0
        %1349 = vmatpush1.msra.mxu0 0.0
        %1350 = vmatprep.subr.mxu0 0.0
        %1351 = vmatpush1.msra.mxu0 0.0
        %1352 = vmatprep.subr.mxu0 0.0
        %1353 = vmatpush1.msra.mxu0 0.0
        %1354 = vmatprep.subr.mxu0 0.0
        %1355 = vmatpush1.msra.mxu0 0.0
        %1356 = vmatprep.subr.mxu0 0.0
        %1357 = vmatpush1.msra.mxu0 0.0
        %1358 = vmatprep.subr.mxu0 0.0
        %1359 = vmatpush1.msra.mxu0 0.0
        %1360 = vmatprep.subr.mxu0 0.0
        %1361 = vmatpush1.msra.mxu0 0.0
        %1362 = vmatprep.subr.mxu0 0.0
        %1363 = vmatpush1.msra.mxu0 0.0
        %1364 = vmatprep.subr.mxu0 0.0
        %1365 = vmatpush1.msra.mxu0 0.0
        %1366 = vmatprep.subr.mxu0 0.0
        %1367 = vmatpush1.msra.mxu0 0.0
        %1368 = vmatprep.mubr.f32.mxu0 0.0
        %1369 = vmatmul.mubr.f32.gmra.mrb[0].mxu0 %v1293
        %v1370 = vpop.f32.mrb[0].mxu0
        %v1371 = vadd.f32 %v1275, %v1370
        %v1372 = vpop.f32.mrb[0].mxu0
        %v1373 = vadd.f32 %v1275, %v1372
        %1374 = vmatprep.mubr.f32.mxu0 0.0
        %1375 = vmatmul.mubr.f32.gmra.mrb[0].mxu0 %v1296
        %v1376 = vpop.f32.mrb[0].mxu0
        %v1377 = vadd.f32 %v1280, %v1376
        %v1378 = vpop.f32.mrb[0].mxu0
        %v1379 = vadd.f32 %v1280, %v1378
        %1380 = vmatprep.mubr.f32.mxu0 0.0
        %1381 = vmatmul.mubr.f32.gmra.mrb[0].mxu0 %v1299
        %v1382 = vpop.f32.mrb[0].mxu0
        %v1383 = vadd.f32 %v1285, %v1382
        %v1384 = vpop.f32.mrb[0].mxu0
        %v1385 = vadd.f32 %v1285, %v1384
        %1386 = vmatprep.mubr.f32.mxu0 0.0
        %1387 = vmatmul.mubr.f32.gmra.mrb[0].mxu0 %v1302
        %v1388 = vpop.f32.mrb[0].mxu0
        %v1389 = vadd.f32 %v1290, %v1388
        %v1390 = vpop.f32.mrb[0].mxu0
        %v1391 = vadd.f32 %v1290, %v1390
        %1392 = vdwg.mxu0
        %1393 = vmatprep.subr.mxu0 %v1244
        %1394 = vmatpush1.msra.mxu0 %v1242
        %1395 = vmatprep.subr.mxu0 %v1250
        %1396 = vmatpush1.msra.mxu0 %v1248
        %1397 = vmatprep.subr.mxu0 %v1256
        %1398 = vmatpush1.msra.mxu0 %v1254
        %1399 = vmatprep.subr.mxu0 %v1262
        %1400 = vmatpush1.msra.mxu0 %v1260
        %1401 = vmatprep.subr.mxu0 0.0
        %1402 = vmatpush1.msra.mxu0 0.0
        %1403 = vmatprep.subr.mxu0 0.0
        %1404 = vmatpush1.msra.mxu0 0.0
        %1405 = vmatprep.subr.mxu0 0.0
        %1406 = vmatpush1.msra.mxu0 0.0
        %1407 = vmatprep.subr.mxu0 0.0
        %1408 = vmatpush1.msra.mxu0 0.0
        %1409 = vmatprep.subr.mxu0 0.0
        %1410 = vmatpush1.msra.mxu0 0.0
        %1411 = vmatprep.subr.mxu0 0.0
        %1412 = vmatpush1.msra.mxu0 0.0
        %1413 = vmatprep.subr.mxu0 0.0
        %1414 = vmatpush1.msra.mxu0 0.0
        %1415 = vmatprep.subr.mxu0 0.0
        %1416 = vmatpush1.msra.mxu0 0.0
        %1417 = vmatprep.subr.mxu0 0.0
        %1418 = vmatpush1.msra.mxu0 0.0
        %1419 = vmatprep.subr.mxu0 0.0
        %1420 = vmatpush1.msra.mxu0 0.0
        %1421 = vmatprep.subr.mxu0 0.0
        %1422 = vmatpush1.msra.mxu0 0.0
        %1423 = vmatprep.subr.mxu0 0.0
        %1424 = vmatpush1.msra.mxu0 0.0
        %1425 = vmatprep.subr.mxu0 0.0
        %1426 = vmatpush1.msra.mxu0 0.0
        %1427 = vmatprep.subr.mxu0 0.0
        %1428 = vmatpush1.msra.mxu0 0.0
        %1429 = vmatprep.subr.mxu0 0.0
        %1430 = vmatpush1.msra.mxu0 0.0
        %1431 = vmatprep.subr.mxu0 0.0
        %1432 = vmatpush1.msra.mxu0 0.0
        %1433 = vmatprep.subr.mxu0 0.0
        %1434 = vmatpush1.msra.mxu0 0.0
        %1435 = vmatprep.subr.mxu0 0.0
        %1436 = vmatpush1.msra.mxu0 0.0
        %1437 = vmatprep.subr.mxu0 0.0
        %1438 = vmatpush1.msra.mxu0 0.0
        %1439 = vmatprep.subr.mxu0 0.0
        %1440 = vmatpush1.msra.mxu0 0.0
        %1441 = vmatprep.subr.mxu0 0.0
        %1442 = vmatpush1.msra.mxu0 0.0
        %1443 = vmatprep.subr.mxu0 0.0
        %1444 = vmatpush1.msra.mxu0 0.0
        %1445 = vmatprep.subr.mxu0 0.0
        %1446 = vmatpush1.msra.mxu0 0.0
        %1447 = vmatprep.subr.mxu0 0.0
        %1448 = vmatpush1.msra.mxu0 0.0
        %1449 = vmatprep.subr.mxu0 0.0
        %1450 = vmatpush1.msra.mxu0 0.0
        %1451 = vmatprep.subr.mxu0 0.0
        %1452 = vmatpush1.msra.mxu0 0.0
        %1453 = vmatprep.subr.mxu0 0.0
        %1454 = vmatpush1.msra.mxu0 0.0
        %1455 = vmatprep.subr.mxu0 0.0
        %1456 = vmatpush1.msra.mxu0 0.0
        %1457 = vmatprep.mubr.f32.mxu0 0.0
        %1458 = vmatmul.mubr.f32.gmra.mrb[0].mxu0 %v1293
        %v1459 = vpop.f32.mrb[0].mxu0
        %v1460 = vadd.f32 %v1275, %v1459
        %v1461 = vpop.f32.mrb[0].mxu0
        %v1462 = vadd.f32 %v1275, %v1461
        %1463 = vmatprep.mubr.f32.mxu0 0.0
        %1464 = vmatmul.mubr.f32.gmra.mrb[0].mxu0 %v1296
        %v1465 = vpop.f32.mrb[0].mxu0
        %v1466 = vadd.f32 %v1280, %v1465
        %v1467 = vpop.f32.mrb[0].mxu0
        %v1468 = vadd.f32 %v1280, %v1467
        %1469 = vmatprep.mubr.f32.mxu0 0.0
        %1470 = vmatmul.mubr.f32.gmra.mrb[0].mxu0 %v1299
        %v1471 = vpop.f32.mrb[0].mxu0
        %v1472 = vadd.f32 %v1285, %v1471
        %v1473 = vpop.f32.mrb[0].mxu0
        %v1474 = vadd.f32 %v1285, %v1473
        %1475 = vmatprep.mubr.f32.mxu0 0.0
        %1476 = vmatmul.mubr.f32.gmra.mrb[0].mxu0 %v1302
        %v1477 = vpop.f32.mrb[0].mxu0
        %v1478 = vadd.f32 %v1290, %v1477
        %v1479 = vpop.f32.mrb[0].mxu0
        %v1480 = vadd.f32 %v1290, %v1479
        %1481 = vdwg.mxu0
        %v1482 = vmax.f32 %v1371, 0.0
        %v1483 = vmax.f32 %v1373, 0.0
        %v1484 = vmax.f32 %v1460, 0.0
        %v1485 = vmax.f32 %v1462, 0.0
        %v1486 = vmax.f32 %v1377, 0.0
        %v1487 = vmax.f32 %v1379, 0.0
        %v1488 = vmax.f32 %v1466, 0.0
        %v1489 = vmax.f32 %v1468, 0.0
        %v1490 = vmax.f32 %v1383, 0.0
        %v1491 = vmax.f32 %v1385, 0.0
        %v1492 = vmax.f32 %v1472, 0.0
        %v1493 = vmax.f32 %v1474, 0.0
        %v1494 = vmax.f32 %v1389, 0.0
        %v1495 = vmax.f32 %v1391, 0.0
        %v1496 = vmax.f32 %v1478, 0.0
        %v1497 = vmax.f32 %v1480, 0.0
        %v1498 = vld [vmem:[%s1 + $0x40] sm:$0xff]
        %v1499 = vld [vmem:[%s1 + $0x48] sm:$0xff]
        %v1500 = vld [vmem:[%s1 + $0x50] sm:$0xff]
        %v1501 = vld [vmem:[%s1 + $0x58] sm:$0xff]
        %v1502 = vld [vmem:[%s2 + $0x40] sm:$0xff]
        %v1503 = vld [vmem:[%s2 + $0x48] sm:$0xff]
        %v1504 = vld [vmem:[%s2 + $0x50] sm:$0xff]
        %v1505 = vld [vmem:[%s2 + $0x58] sm:$0xff]
        %1507 = vset.pattern.permute.xlu0 0
        %1508 = vperm.xlu0 %1507, %v1502
        %v1509 = vpop.permute.xlu0 %1508
        %1512 = vset.pattern.permute.xlu0 0
        %1513 = vperm.xlu0 %1512, %v1503
        %v1514 = vpop.permute.xlu0 %1513
        %1517 = vset.pattern.permute.xlu0 0
        %1518 = vperm.xlu0 %1517, %v1504
        %v1519 = vpop.permute.xlu0 %1518
        %1522 = vset.pattern.permute.xlu0 0
        %1523 = vperm.xlu0 %1522, %v1505
        %v1524 = vpop.permute.xlu0 %1523
        %v1527 = vsel %vm476, %v1498, 0
        %v1530 = vsel %vm476, %v1499, 0
        %v1533 = vsel %vm476, %v1500, 0
        %v1536 = vsel %vm476, %v1501, 0
        %1538 = vmatprep.subr.mxu0 %v1483
        %1539 = vmatpush1.msra.mxu0 %v1482
        %1540 = vmatprep.subr.mxu0 %v1487
        %1541 = vmatpush1.msra.mxu0 %v1486
        %1542 = vmatprep.subr.mxu0 %v1491
        %1543 = vmatpush1.msra.mxu0 %v1490
        %1544 = vmatprep.subr.mxu0 %v1495
        %1545 = vmatpush1.msra.mxu0 %v1494
        %1546 = vmatprep.subr.mxu0 0.0
        %1547 = vmatpush1.msra.mxu0 0.0
        %1548 = vmatprep.subr.mxu0 0.0
        %1549 = vmatpush1.msra.mxu0 0.0
        %1550 = vmatprep.subr.mxu0 0.0
        %1551 = vmatpush1.msra.mxu0 0.0
        %1552 = vmatprep.subr.mxu0 0.0
        %1553 = vmatpush1.msra.mxu0 0.0
        %1554 = vmatprep.subr.mxu0 0.0
        %1555 = vmatpush1.msra.mxu0 0.0
        %1556 = vmatprep.subr.mxu0 0.0
        %1557 = vmatpush1.msra.mxu0 0.0
        %1558 = vmatprep.subr.mxu0 0.0
        %1559 = vmatpush1.msra.mxu0 0.0
        %1560 = vmatprep.subr.mxu0 0.0
        %1561 = vmatpush1.msra.mxu0 0.0
        %1562 = vmatprep.subr.mxu0 0.0
        %1563 = vmatpush1.msra.mxu0 0.0
        %1564 = vmatprep.subr.mxu0 0.0
        %1565 = vmatpush1.msra.mxu0 0.0
        %1566 = vmatprep.subr.mxu0 0.0
        %1567 = vmatpush1.msra.mxu0 0.0
        %1568 = vmatprep.subr.mxu0 0.0
        %1569 = vmatpush1.msra.mxu0 0.0
        %1570 = vmatprep.subr.mxu0 0.0
        %1571 = vmatpush1.msra.mxu0 0.0
        %1572 = vmatprep.subr.mxu0 0.0
        %1573 = vmatpush1.msra.mxu0 0.0
        %1574 = vmatprep.subr.mxu0 0.0
        %1575 = vmatpush1.msra.mxu0 0.0
        %1576 = vmatprep.subr.mxu0 0.0
        %1577 = vmatpush1.msra.mxu0 0.0
        %1578 = vmatprep.subr.mxu0 0.0
        %1579 = vmatpush1.msra.mxu0 0.0
        %1580 = vmatprep.subr.mxu0 0.0
        %1581 = vmatpush1.msra.mxu0 0.0
        %1582 = vmatprep.subr.mxu0 0.0
        %1583 = vmatpush1.msra.mxu0 0.0
        %1584 = vmatprep.subr.mxu0 0.0
        %1585 = vmatpush1.msra.mxu0 0.0
        %1586 = vmatprep.subr.mxu0 0.0
        %1587 = vmatpush1.msra.mxu0 0.0
        %1588 = vmatprep.subr.mxu0 0.0
        %1589 = vmatpush1.msra.mxu0 0.0
        %1590 = vmatprep.subr.mxu0 0.0
        %1591 = vmatpush1.msra.mxu0 0.0
        %1592 = vmatprep.subr.mxu0 0.0
        %1593 = vmatpush1.msra.mxu0 0.0
        %1594 = vmatprep.subr.mxu0 0.0
        %1595 = vmatpush1.msra.mxu0 0.0
        %1596 = vmatprep.subr.mxu0 0.0
        %1597 = vmatpush1.msra.mxu0 0.0
        %1598 = vmatprep.subr.mxu0 0.0
        %1599 = vmatpush1.msra.mxu0 0.0
        %1600 = vmatprep.subr.mxu0 0.0
        %1601 = vmatpush1.msra.mxu0 0.0
        %1602 = vmatprep.mubr.f32.mxu0 0.0
        %1603 = vmatmul.mubr.f32.gmra.mrb[0].mxu0 %v1527
        %v1604 = vpop.f32.mrb[0].mxu0
        %v1605 = vadd.f32 %v1509, %v1604
        %v1606 = vpop.f32.mrb[0].mxu0
        %v1607 = vadd.f32 %v1509, %v1606
        %1608 = vmatprep.mubr.f32.mxu0 0.0
        %1609 = vmatmul.mubr.f32.gmra.mrb[0].mxu0 %v1530
        %v1610 = vpop.f32.mrb[0].mxu0
        %v1611 = vadd.f32 %v1514, %v1610
        %v1612 = vpop.f32.mrb[0].mxu0
        %v1613 = vadd.f32 %v1514, %v1612
        %1614 = vmatprep.mubr.f32.mxu0 0.0
        %1615 = vmatmul.mubr.f32.gmra.mrb[0].mxu0 %v1533
        %v1616 = vpop.f32.mrb[0].mxu0
        %v1617 = vadd.f32 %v1519, %v1616
        %v1618 = vpop.f32.mrb[0].mxu0
        %v1619 = vadd.f32 %v1519, %v1618
        %1620 = vmatprep.mubr.f32.mxu0 0.0
        %1621 = vmatmul.mubr.f32.gmra.mrb[0].mxu0 %v1536
        %v1622 = vpop.f32.mrb[0].mxu0
        %v1623 = vadd.f32 %v1524, %v1622
        %v1624 = vpop.f32.mrb[0].mxu0
        %v1625 = vadd.f32 %v1524, %v1624
        %1626 = vdwg.mxu0
        %1627 = vmatprep.subr.mxu0 %v1485
        %1628 = vmatpush1.msra.mxu0 %v1484
        %1629 = vmatprep.subr.mxu0 %v1489
        %1630 = vmatpush1.msra.mxu0 %v1488
        %1631 = vmatprep.subr.mxu0 %v1493
        %1632 = vmatpush1.msra.mxu0 %v1492
        %1633 = vmatprep.subr.mxu0 %v1497
        %1634 = vmatpush1.msra.mxu0 %v1496
        %1635 = vmatprep.subr.mxu0 0.0
        %1636 = vmatpush1.msra.mxu0 0.0
        %1637 = vmatprep.subr.mxu0 0.0
        %1638 = vmatpush1.msra.mxu0 0.0
        %1639 = vmatprep.subr.mxu0 0.0
        %1640 = vmatpush1.msra.mxu0 0.0
        %1641 = vmatprep.subr.mxu0 0.0
        %1642 = vmatpush1.msra.mxu0 0.0
        %1643 = vmatprep.subr.mxu0 0.0
        %1644 = vmatpush1.msra.mxu0 0.0
        %1645 = vmatprep.subr.mxu0 0.0
        %1646 = vmatpush1.msra.mxu0 0.0
        %1647 = vmatprep.subr.mxu0 0.0
        %1648 = vmatpush1.msra.mxu0 0.0
        %1649 = vmatprep.subr.mxu0 0.0
        %1650 = vmatpush1.msra.mxu0 0.0
        %1651 = vmatprep.subr.mxu0 0.0
        %1652 = vmatpush1.msra.mxu0 0.0
        %1653 = vmatprep.subr.mxu0 0.0
        %1654 = vmatpush1.msra.mxu0 0.0
        %1655 = vmatprep.subr.mxu0 0.0
        %1656 = vmatpush1.msra.mxu0 0.0
        %1657 = vmatprep.subr.mxu0 0.0
        %1658 = vmatpush1.msra.mxu0 0.0
        %1659 = vmatprep.subr.mxu0 0.0
        %1660 = vmatpush1.msra.mxu0 0.0
        %1661 = vmatprep.subr.mxu0 0.0
        %1662 = vmatpush1.msra.mxu0 0.0
        %1663 = vmatprep.subr.mxu0 0.0
        %1664 = vmatpush1.msra.mxu0 0.0
        %1665 = vmatprep.subr.mxu0 0.0
        %1666 = vmatpush1.msra.mxu0 0.0
        %1667 = vmatprep.subr.mxu0 0.0
        %1668 = vmatpush1.msra.mxu0 0.0
        %1669 = vmatprep.subr.mxu0 0.0
        %1670 = vmatpush1.msra.mxu0 0.0
        %1671 = vmatprep.subr.mxu0 0.0
        %1672 = vmatpush1.msra.mxu0 0.0
        %1673 = vmatprep.subr.mxu0 0.0
        %1674 = vmatpush1.msra.mxu0 0.0
        %1675 = vmatprep.subr.mxu0 0.0
        %1676 = vmatpush1.msra.mxu0 0.0
        %1677 = vmatprep.subr.mxu0 0.0
        %1678 = vmatpush1.msra.mxu0 0.0
        %1679 = vmatprep.subr.mxu0 0.0
        %1680 = vmatpush1.msra.mxu0 0.0
        %1681 = vmatprep.subr.mxu0 0.0
        %1682 = vmatpush1.msra.mxu0 0.0
        %1683 = vmatprep.subr.mxu0 0.0
        %1684 = vmatpush1.msra.mxu0 0.0
        %1685 = vmatprep.subr.mxu0 0.0
        %1686 = vmatpush1.msra.mxu0 0.0
        %1687 = vmatprep.subr.mxu0 0.0
        %1688 = vmatpush1.msra.mxu0 0.0
        %1689 = vmatprep.subr.mxu0 0.0
        %1690 = vmatpush1.msra.mxu0 0.0
        %1691 = vmatprep.mubr.f32.mxu0 0.0
        %1692 = vmatmul.mubr.f32.gmra.mrb[0].mxu0 %v1527
        %v1693 = vpop.f32.mrb[0].mxu0
        %v1694 = vadd.f32 %v1509, %v1693
        %v1695 = vpop.f32.mrb[0].mxu0
        %v1696 = vadd.f32 %v1509, %v1695
        %1697 = vmatprep.mubr.f32.mxu0 0.0
        %1698 = vmatmul.mubr.f32.gmra.mrb[0].mxu0 %v1530
        %v1699 = vpop.f32.mrb[0].mxu0
        %v1700 = vadd.f32 %v1514, %v1699
        %v1701 = vpop.f32.mrb[0].mxu0
        %v1702 = vadd.f32 %v1514, %v1701
        %1703 = vmatprep.mubr.f32.mxu0 0.0
        %1704 = vmatmul.mubr.f32.gmra.mrb[0].mxu0 %v1533
        %v1705 = vpop.f32.mrb[0].mxu0
        %v1706 = vadd.f32 %v1519, %v1705
        %v1707 = vpop.f32.mrb[0].mxu0
        %v1708 = vadd.f32 %v1519, %v1707
        %1709 = vmatprep.mubr.f32.mxu0 0.0
        %1710 = vmatmul.mubr.f32.gmra.mrb[0].mxu0 %v1536
        %v1711 = vpop.f32.mrb[0].mxu0
        %v1712 = vadd.f32 %v1524, %v1711
        %v1713 = vpop.f32.mrb[0].mxu0
        %v1714 = vadd.f32 %v1524, %v1713
        %1715 = vdwg.mxu0
        %v1716 = vmax.f32 %v1605, 0.0
        %v1717 = vmax.f32 %v1607, 0.0
        %v1718 = vmax.f32 %v1694, 0.0
        %v1719 = vmax.f32 %v1696, 0.0
        %v1720 = vmax.f32 %v1611, 0.0
        %v1721 = vmax.f32 %v1613, 0.0
        %v1722 = vmax.f32 %v1700, 0.0
        %v1723 = vmax.f32 %v1702, 0.0
        %v1724 = vmax.f32 %v1617, 0.0
        %v1725 = vmax.f32 %v1619, 0.0
        %v1726 = vmax.f32 %v1706, 0.0
        %v1727 = vmax.f32 %v1708, 0.0
        %v1728 = vmax.f32 %v1623, 0.0
        %v1729 = vmax.f32 %v1625, 0.0
        %v1730 = vmax.f32 %v1712, 0.0
        %v1731 = vmax.f32 %v1714, 0.0
        %v1732 = vld [vmem:[%s1 + $0x60] sm:$0xff]
        %v1733 = vld [vmem:[%s1 + $0x68] sm:$0xff]
        %v1734 = vld [vmem:[%s1 + $0x70] sm:$0xff]
        %v1735 = vld [vmem:[%s1 + $0x78] sm:$0xff]
        %v1736 = vld [vmem:[%s2 + $0x60] sm:$0x1]
        %1738 = vset.pattern.permute.xlu0 0
        %1739 = vperm.xlu0 %1738, %v1732
        %v1740 = vpop.permute.xlu0 %1739
        %1743 = vset.pattern.permute.xlu0 0
        %1744 = vperm.xlu0 %1743, %v1733
        %v1745 = vpop.permute.xlu0 %1744
        %1748 = vset.pattern.permute.xlu0 0
        %1749 = vperm.xlu0 %1748, %v1734
        %v1750 = vpop.permute.xlu0 %1749
        %1753 = vset.pattern.permute.xlu0 0
        %1754 = vperm.xlu0 %1753, %v1735
        %v1755 = vpop.permute.xlu0 %1754
        %v1757 = vmul.f32 %v1716, %v1740
        %v1758 = vmul.f32 %v1717, %v1740
        %v1759 = vmul.f32 %v1718, %v1740
        %v1760 = vmul.f32 %v1719, %v1740
        %v1761 = vmul.f32 %v1720, %v1745
        %v1762 = vmul.f32 %v1721, %v1745
        %v1763 = vmul.f32 %v1722, %v1745
        %v1764 = vmul.f32 %v1723, %v1745
        %v1765 = vmul.f32 %v1724, %v1750
        %v1766 = vmul.f32 %v1725, %v1750
        %v1767 = vmul.f32 %v1726, %v1750
        %v1768 = vmul.f32 %v1727, %v1750
        %v1769 = vmul.f32 %v1728, %v1755
        %v1770 = vmul.f32 %v1729, %v1755
        %v1771 = vmul.f32 %v1730, %v1755
        %v1772 = vmul.f32 %v1731, %v1755
        %v1773 = vadd.f32 %v1757, %v1761
        %v1774 = vadd.f32 %v1773, %v1765
        %v1775 = vadd.f32 %v1774, %v1769
        %v1776 = vrot.slane %v1775, 4
        %v1777 = vadd.f32 %v1775, %v1776
        %v1778 = vrot.slane %v1777, 2
        %v1779 = vadd.f32 %v1777, %v1778
        %v1780 = vrot.slane %v1779, 1
        %v1781 = vadd.f32 %v1779, %v1780
        %v1782 = vadd.f32 %v1758, %v1762
        %v1783 = vadd.f32 %v1782, %v1766
        %v1784 = vadd.f32 %v1783, %v1770
        %v1785 = vrot.slane %v1784, 4
        %v1786 = vadd.f32 %v1784, %v1785
        %v1787 = vrot.slane %v1786, 2
        %v1788 = vadd.f32 %v1786, %v1787
        %v1789 = vrot.slane %v1788, 1
        %v1790 = vadd.f32 %v1788, %v1789
        %v1791 = vadd.f32 %v1759, %v1763
        %v1792 = vadd.f32 %v1791, %v1767
        %v1793 = vadd.f32 %v1792, %v1771
        %v1794 = vrot.slane %v1793, 4
        %v1795 = vadd.f32 %v1793, %v1794
        %v1796 = vrot.slane %v1795, 2
        %v1797 = vadd.f32 %v1795, %v1796
        %v1798 = vrot.slane %v1797, 1
        %v1799 = vadd.f32 %v1797, %v1798
        %v1800 = vadd.f32 %v1760, %v1764
        %v1801 = vadd.f32 %v1800, %v1768
        %v1802 = vadd.f32 %v1801, %v1772
        %v1803 = vrot.slane %v1802, 4
        %v1804 = vadd.f32 %v1802, %v1803
        %v1805 = vrot.slane %v1804, 2
        %v1806 = vadd.f32 %v1804, %v1805
        %v1807 = vrot.slane %v1806, 1
        %v1808 = vadd.f32 %v1806, %v1807
        %1810 = vset.pattern.permute.xlu0 0
        %1811 = vperm.xlu0 %1810, %v1736
        %v1812 = vpop.permute.xlu0 %1811
        %v1814 = vadd.f32 %v1781, %v1812
        %v1815 = vadd.f32 %v1790, %v1812
        %v1816 = vadd.f32 %v1799, %v1812
        %v1817 = vadd.f32 %v1808, %v1812
        %v1822 = vcombine.low %v1814, %v1815
        %v1823 = vcombine.low %v1816, %v1817
        %v1825 = vunpack.c.l.s4 1966171168
        %v1826 = vunpack.c.0.s8 %v1825
        %v1827 = vlaneseq
        %v1828 = vshrl.u32 %v1827, 7
        %v1829 = vsub.s32 %v1826, %v1828
        %v1830 = vrot.slane %v1822, %v1829
        %v1832 = vunpack.c.l.s4 1966171168
        %v1833 = vunpack.c.0.s8 %v1832
        %v1834 = vlaneseq
        %v1835 = vshrl.u32 %v1834, 7
        %v1836 = vsub.s32 %v1833, %v1835
        %v1837 = vrot.slane %v1823, %v1836
        %v1838 = vcombine.low %v1830, %v1837
        %v1840 = vunpack.c.l.s4 1966171168
        %v1841 = vunpack.c.0.s8 %v1840
        %v1842 = vlaneseq
        %v1843 = vshrl.u32 %v1842, 7
        %v1844 = vsub.s32 %v1841, %v1843
        %v1845 = vrot.slane %v1838, %v1844
        %s1847 = scalar_lea.vmem %s218, 4 [#allocation3]
        %1848 = vst.msk [vmem:[%s1847] sm:$0xf] %vm1035, %v1845
        %s1849 = sand.u32 %s93, 1
        %s1850 = scalar_lea.sflag [#allocation4], %s1849
        %s1851 = sand.u32 %s93, 1
        %s1852 = smul.addr %s1851, 8
        %s1853 = scalar_lea.vmem [#allocation3], %s1852
        // Predicated region
        $region56: #{tpu_custom_call.1} parent=50 // pred_check
          %p1854 = pneg %p103
        $region57: #{tpu_custom_call.1} parent=50 // pred_check_branch
          %1856 = sbr.rel (%p1854) target = $region59
        $region58: #{tpu_custom_call.1} parent=50 // pred_region
          %s1857 = smul.u32 8, %s17
          %s1859 = ssub.s32 128, 128
          %1860 = vsyncadd %s1850, %s1859
          %s1861 = smul.addr %s1857, 16
          %s1862 = scalar_lea.hbm %s3, %s1861
          %s1864 = sshll.u32 %s1853, 4
          %s1865 = int_to_ptr.vmem [resolvable:$true] %s1864
          %1867 = dma.vmem_to_hbm [thread:$0]  %s1865, 128, %s1862, %s1850
        $region59: #{tpu_custom_call.1} parent=50 // pred_fallthru
          _
      $region51: #{tpu_custom_call.1} parent=5 // pred_fallthru
        _
      %p1868 = scmp.le.s32.totalorder 2, %s12
      // Predicated region
      $region60: #{tpu_custom_call.1} parent=5 // pred_check
        %p1869 = pneg %p1868
      $region61: #{tpu_custom_call.1} parent=5 // pred_check_branch
        %1871 = sbr.rel (%p1869) target = $region63
      $region62: #{tpu_custom_call.1} parent=5 // pred_region
        %s1872 = ssub.s32 %s12, 2
        // Predicated region
        $region64: #{tpu_custom_call.1} parent=62 // pred_check
          %p1873 = pneg %p109
        $region65: #{tpu_custom_call.1} parent=62 // pred_check_branch
          %1875 = sbr.rel (%p1873) target = $region67
        $region66: #{tpu_custom_call.1} parent=62 // pred_region
          %s1876 = sand.u32 %s94, 1
          %s1877 = scalar_lea.sflag [#allocation4], %s1876
          %s1878 = sand.u32 %s94, 1
          %s1879 = smul.addr %s1878, 8
          %s1880 = scalar_lea.vmem [#allocation3], %s1879
          %1881 = dma.done %s1877, 128
        $region67: #{tpu_custom_call.1} parent=62 // pred_fallthru
          _
      $region63: #{tpu_custom_call.1} parent=5 // pred_fallthru
        _
    $region6: #{tpu_custom_call.1} parent=1 // loop_footer
      %s16 = sadd.s32 1, %s12
    $region7: #{tpu_custom_call.1} parent=1 // loop_footer_branch
      %11 = sbr.rel target = $region3
    $region8: #{tpu_custom_call.1} parent=1 // loop_exit
      _
    %1882 = vsyncpa [#allocation4], 1
    %s1883 = scalar_lea.sflag [#allocation4], 1
    %1884 = vsyncpa %s1883, 1

</llo_original>
